<compile_context>
chip_gen: v6e
topology: v6e:2x2x1
jax: 0.10.0
libtpu: 0.0.40
codegen_flags: <defaults>
</compile_context>

<pallas_src>
import functools

import jax
import jax.numpy as jnp
from jax.experimental import pallas as pl
from jax.experimental.pallas import tpu as pltpu

_SUBLANE = 16                      # bf16 activation tiles: batch tile must be a multiple of 16
_VMEM_BUDGET = 40 * 1024 * 1024    # planning budget for tiles + resident params (v7x-safe)
_VMEM_LIMIT = 48 * 1024 * 1024     # explicit scoped-VMEM limit handed to Mosaic


def _round_up(x, m):
    return ((x + m - 1) // m) * m


def _lane_pad(dim):
    # 256-lane alignment only for layers wide enough to be MXU-bound (matches the
    # 2x256^2 MXU on v6e/v7x); small dims stay at 128 so padding doesn't waste
    # VMEM/bandwidth (v5e's 4x128^2 MXU prefers 128 anyway).
    return _round_up(dim, 256 if dim >= 512 else 128)


def _make_mlp_kernel(num_hidden):
    """Fused kernel: x_tile, (w, b) x num_hidden, w_out, b_out -> out_tile."""

    def kernel(*refs):
        x_ref = refs[0]
        o_ref = refs[-1]
        prm = refs[1:-1]

        h = x_ref[...]                                        # (tb, in_pad) bf16
        for i in range(num_hidden):
            w = prm[2 * i][...]                               # (in_pad, out_pad) bf16
            b = prm[2 * i + 1][...]                           # (1, out_pad) f32
            acc = jnp.dot(h, w, preferred_element_type=jnp.float32) + b
            h = jnp.maximum(acc, 0.0).astype(jnp.bfloat16)    # ReLU + cast in one VPU pass
        w_out = prm[-2][...]
        b_out = prm[-1][...]
        out = jnp.dot(h, w_out, preferred_element_type=jnp.float32) + b_out
        o_ref[...] = out.astype(o_ref.dtype)

    return kernel


def init_mlp_params(key, input_dim, output_dim, hidden_dims):
    """Deterministic f32 params (PyTorch nn.Linear-style uniform init).

    Returns flat list [w0, b0, ..., w_out, b_out]; weights already (in, out), biases (out,).
    """
    params = []
    last_dim = input_dim
    for d in list(hidden_dims) + [output_dim]:
        key, kw, kb = jax.random.split(key, 3)
        bound = 1.0 / float(last_dim) ** 0.5
        w = jax.random.uniform(kw, (last_dim, d), jnp.float32, -bound, bound)
        b = jax.random.uniform(kb, (d,), jnp.float32, -bound, bound)
        params += [w, b]
        last_dim = d
    return params


def pad_params_for_kernel(params):
    """Zero-pad every feature dim to its lane-aligned width; weights -> bf16, biases -> (1,d) f32."""
    padded = []
    for i in range(0, len(params), 2):
        w, b = params[i], params[i + 1]
        in_d, out_d = w.shape
        in_p, out_p = _lane_pad(in_d), _lane_pad(out_d)
        w_p = jnp.pad(w, ((0, in_p - in_d), (0, out_p - out_d))).astype(jnp.bfloat16)
        b_p = jnp.pad(b, (0, out_p - out_d)).reshape(1, out_p).astype(jnp.float32)
        padded += [w_p, b_p]
    return padded


def _choose_tile_batch(cap, pb0, dims_padded, param_bytes):
    """Largest batch tile (multiple of 16) whose VMEM footprint fits the budget."""
    in_pad, out_pad = dims_padded[0], dims_padded[-1]
    widest = max(dims_padded)
    # Per-row cost: double-buffered bf16 x tile + double-buffered f32 out tile
    # + generous f32 working intermediates of the widest layer.
    per_row = 2 * in_pad * 2 + 2 * out_pad * 4 + 2 * widest * 4
    avail = _VMEM_BUDGET - param_bytes
    tb = avail // per_row if avail > 0 else _SUBLANE
    tb = max(_SUBLANE, (int(tb) // _SUBLANE) * _SUBLANE)
    cap = max(_SUBLANE, (int(cap) // _SUBLANE) * _SUBLANE)
    return int(min(tb, cap, pb0))


def _resident_spec(shape, single_buffer):
    """Constant-index (VMEM-resident) parameter block; single-buffered when requested."""
    if single_buffer and hasattr(pl, "Buffered"):
        try:
            return pl.BlockSpec(shape, lambda i: (0, 0), pipeline_mode=pl.Buffered(1))
        except TypeError:
            pass
    return pl.BlockSpec(shape, lambda i: (0, 0))


@functools.partial(
    jax.jit,
    static_argnames=("num_hidden", "output_dim", "tile_batch", "single_buffer_params"))
def mlp_classifier_forward(x, padded_params, *, num_hidden, output_dim,
                           tile_batch=1024, single_buffer_params=True):
    batch, in_dim = x.shape
    in_pad = padded_params[0].shape[0]
    out_pad = padded_params[-1].shape[-1]
    dims_padded = [in_pad] + [padded_params[2 * i + 1].shape[1]
                              for i in range(num_hidden + 1)]
    param_bytes = sum(p.size * p.dtype.itemsize for p in padded_params)

    # Batch tile: VMEM-budgeted, forced to a multiple of 16 (bf16 sublane packing).
    pb0 = _round_up(batch, _SUBLANE)
    tb = _choose_tile_batch(tile_batch, pb0, dims_padded, param_bytes)
    # v7x megacore: make sure there are >= 2 grid steps when the batch allows, so
    # dimension_semantics=("parallel",) can split across both TensorCores.
    if pb0 // tb < 2 and pb0 >= 2 * _SUBLANE:
        tb = _round_up(pl.cdiv(pb0, 2), _SUBLANE)
    pb = _round_up(pb0, tb)

    # Single fused pass: batch-pad + feature-pad + bf16 cast (no extra HBM round trips).
    if pb != batch or in_pad != in_dim:
        x = jnp.pad(x, ((0, pb - batch), (0, in_pad - in_dim)))
    x = x.astype(jnp.bfloat16)

    grid = (pb // tb,)
    kernel = _make_mlp_kernel(num_hidden)

    in_specs = [pl.BlockSpec((tb, in_pad), lambda i: (i, 0))]
    for p in padded_params:
        in_specs.append(_resident_spec(p.shape, single_buffer_params))
    out_specs = pl.BlockSpec((tb, out_pad), lambda i: (i, 0))

    out = pl.pallas_call(
        kernel,
        out_shape=jax.ShapeDtypeStruct((pb, out_pad), jnp.float32),
        grid=grid,
        in_specs=in_specs,
        out_specs=out_specs,
        compiler_params=pltpu.CompilerParams(
            dimension_semantics=("parallel",),
            vmem_limit_bytes=_VMEM_LIMIT),
    )(x, *padded_params)

    # Strip batch padding and lane padding of the logits.
    return out[:batch, :output_dim]


def mlp_reference_f32(x, params, num_hidden):
    """Plain-JAX f32 reference matching the PyTorch module exactly."""
    h = x
    for i in range(num_hidden):
        h = jnp.maximum(h @ params[2 * i] + params[2 * i + 1], 0.0)
    return h @ params[-2] + params[-1]


def mlp_reference_bf16(x, params, num_hidden):
    """Reference emulating the kernel's bf16-operand / f32-accumulate matmuls."""
    h = x.astype(jnp.float32)
    for i in range(num_hidden):
        w = params[2 * i].astype(jnp.bfloat16)
        h = jnp.dot(h.astype(jnp.bfloat16), w,
                    preferred_element_type=jnp.float32) + params[2 * i + 1]
        h = jnp.maximum(h, 0.0)
    w = params[-2].astype(jnp.bfloat16)
    return jnp.dot(h.astype(jnp.bfloat16), w,
                   preferred_element_type=jnp.float32) + params[-1]


if __name__ == "__main__":
    # Small shapes implied by the module's forward: 2-D input (batch, input_dim).
    batch = 20
    input_dim = 32
    hidden_dims = [64, 32]
    output_dim = 8

    key = jax.random.PRNGKey(0)
    key, kx = jax.random.split(key)
    x = jax.random.normal(kx, (batch, input_dim), jnp.float32)

    raw_params = init_mlp_params(key, input_dim, output_dim, hidden_dims)
    padded_params = pad_params_for_kernel(raw_params)

    fwd = functools.partial(mlp_classifier_forward,
                            num_hidden=len(hidden_dims),
                            output_dim=output_dim,
                            tile_batch=1024)
    try:
        out = jax.block_until_ready(fwd(x, padded_params, single_buffer_params=True))
    except Exception:
        # Fallback for Pallas builds that reject single-buffered (Buffered(1)) operands.
        out = jax.block_until_ready(fwd(x, padded_params, single_buffer_params=False))

    assert out.shape == (batch, output_dim), out.shape

    ref_bf16 = mlp_reference_bf16(x, raw_params, len(hidden_dims))
    ref_f32 = mlp_reference_f32(x, raw_params, len(hidden_dims))
    # NOTE: bf16-weight tolerance vs the f32 module grows with layer width; fine at toy dims.
    assert jnp.allclose(out, ref_bf16, atol=1e-2, rtol=1e-2), "mismatch vs bf16-matched reference"
    assert jnp.allclose(out, ref_f32, atol=5e-2, rtol=5e-2), "mismatch vs f32 module reference"

    print("KERNEL_OK")
</pallas_src>

<mosaic_0001>
module attributes {stable_mosaic.version = 11 : i64} {
  func.func @kernel(%arg0: i32, %arg1: memref<16x128xbf16, #tpu.memory_space<vmem>>, %arg2: memref<128x128xbf16, #tpu.memory_space<vmem>>, %arg3: memref<1x128xf32, #tpu.memory_space<vmem>>, %arg4: memref<128x128xbf16, #tpu.memory_space<vmem>>, %arg5: memref<1x128xf32, #tpu.memory_space<vmem>>, %arg6: memref<128x128xbf16, #tpu.memory_space<vmem>>, %arg7: memref<1x128xf32, #tpu.memory_space<vmem>>, %arg8: memref<16x128xf32, #tpu.memory_space<vmem>>) attributes {dimension_semantics = [#tpu.dimension_semantics<parallel>], iteration_bounds = array<i64: 2>, scalar_prefetch = 0 : i64, scratch_operands = 0 : i64, tpu.core_type = #tpu.core_type<tc>, window_params = [{transform_indices = @transform_0, window_bounds = array<i64: 16, 128>}, {pipeline_mode = #tpu.pipeline_mode<synchronous>, transform_indices = @transform_1, window_bounds = array<i64: 128, 128>}, {pipeline_mode = #tpu.pipeline_mode<synchronous>, transform_indices = @transform_2, window_bounds = array<i64: 1, 128>}, {pipeline_mode = #tpu.pipeline_mode<synchronous>, transform_indices = @transform_3, window_bounds = array<i64: 128, 128>}, {pipeline_mode = #tpu.pipeline_mode<synchronous>, transform_indices = @transform_4, window_bounds = array<i64: 1, 128>}, {pipeline_mode = #tpu.pipeline_mode<synchronous>, transform_indices = @transform_5, window_bounds = array<i64: 128, 128>}, {pipeline_mode = #tpu.pipeline_mode<synchronous>, transform_indices = @transform_6, window_bounds = array<i64: 1, 128>}, {transform_indices = @transform_7, window_bounds = array<i64: 16, 128>}]} {
    %c0 = arith.constant 0 : index
    %c0_0 = arith.constant 0 : index
    %0 = vector.load %arg1[%c0, %c0_0] : memref<16x128xbf16, #tpu.memory_space<vmem>>, vector<16x128xbf16>
    %c0_1 = arith.constant 0 : index
    %c0_2 = arith.constant 0 : index
    %1 = vector.load %arg2[%c0_1, %c0_2] : memref<128x128xbf16, #tpu.memory_space<vmem>>, vector<128x128xbf16>
    %c0_3 = arith.constant 0 : index
    %c0_4 = arith.constant 0 : index
    %2 = vector.load %arg3[%c0_3, %c0_4] : memref<1x128xf32, #tpu.memory_space<vmem>>, vector<1x128xf32>
    %cst = arith.constant dense<0.000000e+00> : vector<16x128xf32>
    %3 = tpu.matmul %0, %1, %cst {dimension_numbers = #tpu.dot_dimension_numbers<[1], [0], [0], [1], [0, 0, 1, 1], [], []>} : vector<16x128xbf16>, vector<128x128xbf16>, vector<16x128xf32> -> vector<16x128xf32>
    %4 = vector.broadcast %2 : vector<1x128xf32> to vector<16x128xf32>
    %5 = arith.addf %3, %4 : vector<16x128xf32>
    %cst_5 = arith.constant 0.000000e+00 : f32
    %6 = vector.broadcast %cst_5 : f32 to vector<16x128xf32>
    %7 = arith.maximumf %5, %6 : vector<16x128xf32>
    %8 = arith.truncf %7 : vector<16x128xf32> to vector<16x128xbf16>
    %c0_6 = arith.constant 0 : index
    %c0_7 = arith.constant 0 : index
    %9 = vector.load %arg4[%c0_6, %c0_7] : memref<128x128xbf16, #tpu.memory_space<vmem>>, vector<128x128xbf16>
    %c0_8 = arith.constant 0 : index
    %c0_9 = arith.constant 0 : index
    %10 = vector.load %arg5[%c0_8, %c0_9] : memref<1x128xf32, #tpu.memory_space<vmem>>, vector<1x128xf32>
    %cst_10 = arith.constant dense<0.000000e+00> : vector<16x128xf32>
    %11 = tpu.matmul %8, %9, %cst_10 {dimension_numbers = #tpu.dot_dimension_numbers<[1], [0], [0], [1], [0, 0, 1, 1], [], []>} : vector<16x128xbf16>, vector<128x128xbf16>, vector<16x128xf32> -> vector<16x128xf32>
    %12 = vector.broadcast %10 : vector<1x128xf32> to vector<16x128xf32>
    %13 = arith.addf %11, %12 : vector<16x128xf32>
    %cst_11 = arith.constant 0.000000e+00 : f32
    %14 = vector.broadcast %cst_11 : f32 to vector<16x128xf32>
    %15 = arith.maximumf %13, %14 : vector<16x128xf32>
    %16 = arith.truncf %15 : vector<16x128xf32> to vector<16x128xbf16>
    %c0_12 = arith.constant 0 : index
    %c0_13 = arith.constant 0 : index
    %17 = vector.load %arg6[%c0_12, %c0_13] : memref<128x128xbf16, #tpu.memory_space<vmem>>, vector<128x128xbf16>
    %c0_14 = arith.constant 0 : index
    %c0_15 = arith.constant 0 : index
    %18 = vector.load %arg7[%c0_14, %c0_15] : memref<1x128xf32, #tpu.memory_space<vmem>>, vector<1x128xf32>
    %cst_16 = arith.constant dense<0.000000e+00> : vector<16x128xf32>
    %19 = tpu.matmul %16, %17, %cst_16 {dimension_numbers = #tpu.dot_dimension_numbers<[1], [0], [0], [1], [0, 0, 1, 1], [], []>} : vector<16x128xbf16>, vector<128x128xbf16>, vector<16x128xf32> -> vector<16x128xf32>
    %20 = vector.broadcast %18 : vector<1x128xf32> to vector<16x128xf32>
    %21 = arith.addf %19, %20 : vector<16x128xf32>
    %c0_17 = arith.constant 0 : index
    %c0_18 = arith.constant 0 : index
    %22 = vector.load %arg8[%c0_17, %c0_18] : memref<16x128xf32, #tpu.memory_space<vmem>>, vector<16x128xf32>
    tpu.vector_store %arg8[%c0_17, %c0_18], %21 {strides = array<i32>} : memref<16x128xf32, #tpu.memory_space<vmem>>, vector<16x128xf32>,
    return
  }
  func.func @transform_0(%arg0: i32) -> (i32, i32) {
    %c0_i32 = arith.constant 0 : i32
    %c0_i32_0 = arith.constant 0 : i32
    return %arg0, %c0_i32 : i32, i32
  }
  func.func @transform_1(%arg0: i32) -> (i32, i32) {
    %c0_i32 = arith.constant 0 : i32
    %c0_i32_0 = arith.constant 0 : i32
    %c0_i32_1 = arith.constant 0 : i32
    return %c0_i32, %c0_i32_0 : i32, i32
  }
  func.func @transform_2(%arg0: i32) -> (i32, i32) {
    %c0_i32 = arith.constant 0 : i32
    %c0_i32_0 = arith.constant 0 : i32
    %c0_i32_1 = arith.constant 0 : i32
    return %c0_i32, %c0_i32_0 : i32, i32
  }
  func.func @transform_3(%arg0: i32) -> (i32, i32) {
    %c0_i32 = arith.constant 0 : i32
    %c0_i32_0 = arith.constant 0 : i32
    %c0_i32_1 = arith.constant 0 : i32
    return %c0_i32, %c0_i32_0 : i32, i32
  }
  func.func @transform_4(%arg0: i32) -> (i32, i32) {
    %c0_i32 = arith.constant 0 : i32
    %c0_i32_0 = arith.constant 0 : i32
    %c0_i32_1 = arith.constant 0 : i32
    return %c0_i32, %c0_i32_0 : i32, i32
  }
  func.func @transform_5(%arg0: i32) -> (i32, i32) {
    %c0_i32 = arith.constant 0 : i32
    %c0_i32_0 = arith.constant 0 : i32
    %c0_i32_1 = arith.constant 0 : i32
    return %c0_i32, %c0_i32_0 : i32, i32
  }
  func.func @transform_6(%arg0: i32) -> (i32, i32) {
    %c0_i32 = arith.constant 0 : i32
    %c0_i32_0 = arith.constant 0 : i32
    %c0_i32_1 = arith.constant 0 : i32
    return %c0_i32, %c0_i32_0 : i32, i32
  }
  func.func @transform_7(%arg0: i32) -> (i32, i32) {
    %c0_i32 = arith.constant 0 : i32
    %c0_i32_0 = arith.constant 0 : i32
    return %arg0, %c0_i32 : i32, i32
  }
}

module attributes {stable_mosaic.version = 11 : i64} {
  func.func @kernel(%arg0: i32, %arg1: memref<16x128xbf16, #tpu.memory_space<vmem>>, %arg2: memref<128x128xbf16, #tpu.memory_space<vmem>>, %arg3: memref<1x128xf32, #tpu.memory_space<vmem>>, %arg4: memref<128x128xbf16, #tpu.memory_space<vmem>>, %arg5: memref<1x128xf32, #tpu.memory_space<vmem>>, %arg6: memref<128x128xbf16, #tpu.memory_space<vmem>>, %arg7: memref<1x128xf32, #tpu.memory_space<vmem>>, %arg8: memref<16x128xf32, #tpu.memory_space<vmem>>) attributes {dimension_semantics = [#tpu.dimension_semantics<parallel>], iteration_bounds = array<i64: 2>, scalar_prefetch = 0 : i64, scratch_operands = 0 : i64, tpu.core_type = #tpu.core_type<tc>, window_params = [{transform_indices = @transform_0, window_bounds = array<i64: 16, 128>}, {pipeline_mode = #tpu.pipeline_mode<synchronous>, transform_indices = @transform_1, window_bounds = array<i64: 128, 128>}, {pipeline_mode = #tpu.pipeline_mode<synchronous>, transform_indices = @transform_2, window_bounds = array<i64: 1, 128>}, {pipeline_mode = #tpu.pipeline_mode<synchronous>, transform_indices = @transform_3, window_bounds = array<i64: 128, 128>}, {pipeline_mode = #tpu.pipeline_mode<synchronous>, transform_indices = @transform_4, window_bounds = array<i64: 1, 128>}, {pipeline_mode = #tpu.pipeline_mode<synchronous>, transform_indices = @transform_5, window_bounds = array<i64: 128, 128>}, {pipeline_mode = #tpu.pipeline_mode<synchronous>, transform_indices = @transform_6, window_bounds = array<i64: 1, 128>}, {transform_indices = @transform_7, window_bounds = array<i64: 16, 128>}]} {
    %c0 = arith.constant 0 : index
    %c0_0 = arith.constant 0 : index
    %0 = vector.load %arg1[%c0, %c0_0] : memref<16x128xbf16, #tpu.memory_space<vmem>>, vector<16x128xbf16>
    %c0_1 = arith.constant 0 : index
    %c0_2 = arith.constant 0 : index
    %1 = vector.load %arg2[%c0_1, %c0_2] : memref<128x128xbf16, #tpu.memory_space<vmem>>, vector<128x128xbf16>
    %c0_3 = arith.constant 0 : index
    %c0_4 = arith.constant 0 : index
    %2 = vector.load %arg3[%c0_3, %c0_4] : memref<1x128xf32, #tpu.memory_space<vmem>>, vector<1x128xf32>
    %cst = arith.constant dense<0.000000e+00> : vector<16x128xf32>
    %3 = tpu.matmul %0, %1, %cst {dimension_numbers = #tpu.dot_dimension_numbers<[1], [0], [0], [1], [0, 0, 1, 1], [], []>} : vector<16x128xbf16>, vector<128x128xbf16>, vector<16x128xf32> -> vector<16x128xf32>
    %4 = vector.broadcast %2 : vector<1x128xf32> to vector<16x128xf32>
    %5 = arith.addf %3, %4 : vector<16x128xf32>
    %cst_5 = arith.constant 0.000000e+00 : f32
    %6 = vector.broadcast %cst_5 : f32 to vector<16x128xf32>
    %7 = arith.maximumf %5, %6 : vector<16x128xf32>
    %8 = arith.truncf %7 : vector<16x128xf32> to vector<16x128xbf16>
    %c0_6 = arith.constant 0 : index
    %c0_7 = arith.constant 0 : index
    %9 = vector.load %arg4[%c0_6, %c0_7] : memref<128x128xbf16, #tpu.memory_space<vmem>>, vector<128x128xbf16>
    %c0_8 = arith.constant 0 : index
    %c0_9 = arith.constant 0 : index
    %10 = vector.load %arg5[%c0_8, %c0_9] : memref<1x128xf32, #tpu.memory_space<vmem>>, vector<1x128xf32>
    %cst_10 = arith.constant dense<0.000000e+00> : vector<16x128xf32>
    %11 = tpu.matmul %8, %9, %cst_10 {dimension_numbers = #tpu.dot_dimension_numbers<[1], [0], [0], [1], [0, 0, 1, 1], [], []>} : vector<16x128xbf16>, vector<128x128xbf16>, vector<16x128xf32> -> vector<16x128xf32>
    %12 = vector.broadcast %10 : vector<1x128xf32> to vector<16x128xf32>
    %13 = arith.addf %11, %12 : vector<16x128xf32>
    %cst_11 = arith.constant 0.000000e+00 : f32
    %14 = vector.broadcast %cst_11 : f32 to vector<16x128xf32>
    %15 = arith.maximumf %13, %14 : vector<16x128xf32>
    %16 = arith.truncf %15 : vector<16x128xf32> to vector<16x128xbf16>
    %c0_12 = arith.constant 0 : index
    %c0_13 = arith.constant 0 : index
    %17 = vector.load %arg6[%c0_12, %c0_13] : memref<128x128xbf16, #tpu.memory_space<vmem>>, vector<128x128xbf16>
    %c0_14 = arith.constant 0 : index
    %c0_15 = arith.constant 0 : index
    %18 = vector.load %arg7[%c0_14, %c0_15] : memref<1x128xf32, #tpu.memory_space<vmem>>, vector<1x128xf32>
    %cst_16 = arith.constant dense<0.000000e+00> : vector<16x128xf32>
    %19 = tpu.matmul %16, %17, %cst_16 {dimension_numbers = #tpu.dot_dimension_numbers<[1], [0], [0], [1], [0, 0, 1, 1], [], []>} : vector<16x128xbf16>, vector<128x128xbf16>, vector<16x128xf32> -> vector<16x128xf32>
    %20 = vector.broadcast %18 : vector<1x128xf32> to vector<16x128xf32>
    %21 = arith.addf %19, %20 : vector<16x128xf32>
    %c0_17 = arith.constant 0 : index
    %c0_18 = arith.constant 0 : index
    %22 = vector.load %arg8[%c0_17, %c0_18] : memref<16x128xf32, #tpu.memory_space<vmem>>, vector<16x128xf32>
    tpu.vector_store %arg8[%c0_17, %c0_18], %21 {strides = array<i32>} : memref<16x128xf32, #tpu.memory_space<vmem>>, vector<16x128xf32>,
    return
  }
  func.func @transform_0(%arg0: i32) -> (i32, i32) {
    %c0_i32 = arith.constant 0 : i32
    %c0_i32_0 = arith.constant 0 : i32
    return %arg0, %c0_i32 : i32, i32
  }
  func.func @transform_1(%arg0: i32) -> (i32, i32) {
    %c0_i32 = arith.constant 0 : i32
    %c0_i32_0 = arith.constant 0 : i32
    %c0_i32_1 = arith.constant 0 : i32
    return %c0_i32, %c0_i32_0 : i32, i32
  }
  func.func @transform_2(%arg0: i32) -> (i32, i32) {
    %c0_i32 = arith.constant 0 : i32
    %c0_i32_0 = arith.constant 0 : i32
    %c0_i32_1 = arith.constant 0 : i32
    return %c0_i32, %c0_i32_0 : i32, i32
  }
  func.func @transform_3(%arg0: i32) -> (i32, i32) {
    %c0_i32 = arith.constant 0 : i32
    %c0_i32_0 = arith.constant 0 : i32
    %c0_i32_1 = arith.constant 0 : i32
    return %c0_i32, %c0_i32_0 : i32, i32
  }
  func.func @transform_4(%arg0: i32) -> (i32, i32) {
    %c0_i32 = arith.constant 0 : i32
    %c0_i32_0 = arith.constant 0 : i32
    %c0_i32_1 = arith.constant 0 : i32
    return %c0_i32, %c0_i32_0 : i32, i32
  }
  func.func @transform_5(%arg0: i32) -> (i32, i32) {
    %c0_i32 = arith.constant 0 : i32
    %c0_i32_0 = arith.constant 0 : i32
    %c0_i32_1 = arith.constant 0 : i32
    return %c0_i32, %c0_i32_0 : i32, i32
  }
  func.func @transform_6(%arg0: i32) -> (i32, i32) {
    %c0_i32 = arith.constant 0 : i32
    %c0_i32_0 = arith.constant 0 : i32
    %c0_i32_1 = arith.constant 0 : i32
    return %c0_i32, %c0_i32_0 : i32, i32
  }
  func.func @transform_7(%arg0: i32) -> (i32, i32) {
    %c0_i32 = arith.constant 0 : i32
    %c0_i32_0 = arith.constant 0 : i32
    return %arg0, %c0_i32 : i32, i32
  }
}

</mosaic_0001>

<llo_original>
// kernel: mlp_classifier_forward.1
$region0: #{mlp_classifier_forward.1}
  #allocation0 [shape = 'u32[]', space=smem, size = 0x4, offset = 0x4, fixed_abs, tag = 'smem constant byte address 0x4 - core index']
  #allocation1 [shape = 'u32[144,128]{1,0:T(1,128)}', space=vmem, size = 0x12000, scoped, tag = 'internal scratch']
  %s0 = inlined_call_operand.vmem [shape: bf16[32,128], index: 0, kind: input, shape index: {}]
  %s1 = inlined_call_operand.vmem [shape: bf16[128,128], index: 1, kind: input, shape index: {}]
  %s2 = inlined_call_operand.vmem [shape: f32[1,128], index: 2, kind: input, shape index: {}]
  %s3 = inlined_call_operand.hbm [shape: bf16[128,128], index: 3, kind: input, shape index: {}]
  %s4 = inlined_call_operand.vmem [shape: f32[1,128], index: 4, kind: input, shape index: {}]
  %s5 = inlined_call_operand.hbm [shape: bf16[128,128], index: 5, kind: input, shape index: {}]
  %s6 = inlined_call_operand.vmem [shape: f32[1,128], index: 6, kind: input, shape index: {}]
  %s7 = inlined_call_operand.vmem [shape: f32[32,128], index: 7, kind: output, shape index: {}]
  %s8 = sld [smem:[#allocation0]]
  $region69: #{mlp_classifier_forward.1} parent=0
    _
  %s10 = ssub.s32 1, %s8
  %s11 = scalar_select 0, %s10, %s8
  $region1: #{mlp_classifier_forward.1} parent=0
    #allocation2 [shape = 'u8[32768]{0}', space=vmem, size = 0x8000, scoped, tag = 'input window, operand 3, single buffered']
    #allocation3 [shape = 's32[2]{0}', space=sflag, size = 0x8, scoped, tag = 'scoped memory for mlp_classifier_forward.1']
    #allocation4 [shape = 'u8[32768]{0}', space=vmem, size = 0x8000, scoped, tag = 'input window, operand 5, single buffered']
    #allocation5 [shape = 's32[1]{0}', space=sflag, size = 0x4, scoped, tag = 'scoped memory for mlp_classifier_forward.1']
    %12 = vsyncpa [#allocation3], 0
    %13 = vsyncpa [#allocation5], 0
    loop: start=0, step=1, limit=4
    $region2: #{mlp_classifier_forward.1} parent=1 // loop_pre_header
      _
    $region3: #{mlp_classifier_forward.1} parent=1 // loop_header
      %s15 = sphi 0, %s19
      %p16 = scmp.ge.s32.totalorder %s15, 4
      %s25 = sphi 0, %s27
      %s28 = sphi 0, %s25
      %s29 = sphi 0, %s28
      %s45 = sphi 0, %s29
      %s49 = sphi 0, %s49
      %s51 = sphi 0, %s49
      %s52 = sphi 0, %s51
      %s66 = sphi 0, %s52
      %s70 = sphi 0, %s70
      %s72 = sphi 0, %s70
      %s73 = sphi 0, %s72
      %s87 = sphi 0, %s73
      %s91 = sphi 0, %s91
      %s93 = sphi 0, %s91
      %s94 = sphi 0, %s93
      %s108 = sphi 0, %s94
      %s112 = sphi 0, %s112
      %s114 = sphi 0, %s112
      %s115 = sphi 0, %s114
      %s129 = sphi 0, %s115
      %s133 = sphi 0, %s133
      %s135 = sphi 0, %s133
      %s136 = sphi 0, %s135
      %s150 = sphi 0, %s136
      %s154 = sphi 0, %s154
      %s156 = sphi 0, %s154
      %s157 = sphi 0, %s156
      %s171 = sphi 0, %s157
      %s177 = sphi 0, %s179
      %s180 = sphi 0, %s177
      %s181 = sphi 0, %s180
      %s197 = sphi 0, %s181
    $region4: #{mlp_classifier_forward.1} parent=1 // loop_header_branch
      %18 = sbr.rel (%p16) target = $region8
    $region5: #{mlp_classifier_forward.1} parent=1 // loop_body
      %s20 = ssub.s32 %s15, 1
      %s21 = ssub.s32 %s15, 2
      %s22 = sadd.s32 %s15, 1
      %s23 = ssub.s32 %s15, %s22
      %p24 = scmp.eq.s32.totalorder %s23, 0
      %s26 = sadd.s32 %s25, 1
      %s27 = scalar_select %p24, %s25, %s26
      %p30 = pneg %p24
      %p31 = scmp.eq.s32.totalorder %s15, 1
      %p32 = por %p30, %p31
      %p33 = scmp.ne.s32.totalorder %s25, %s28
      %p34 = scmp.eq.s32.totalorder %s15, 0
      %p35 = por %p33, %p34
      %p36 = scmp.ne.s32.totalorder %s25, %s28
      %p37 = scmp.eq.s32.totalorder %s20, 1
      %p38 = por %p36, %p37
      %p39 = scmp.ne.s32.totalorder %s28, %s29
      %p40 = scmp.eq.s32.totalorder %s20, 0
      %p41 = por %p39, %p40
      %p42 = scmp.ne.s32.totalorder %s28, %s29
      %p43 = scmp.eq.s32.totalorder %s21, 1
      %p44 = por %p42, %p43
      %p46 = scmp.ne.s32.totalorder %s29, %s45
      %p47 = scmp.eq.s32.totalorder %s21, 0
      %p48 = por %p46, %p47
      %s50 = sadd.s32 %s49, 1
      %p53 = scmp.eq.s32.totalorder %s15, 1
      %p54 = scmp.ne.s32.totalorder %s49, %s51
      %p55 = scmp.eq.s32.totalorder %s15, 0
      %p56 = por %p54, %p55
      %p57 = scmp.ne.s32.totalorder %s49, %s51
      %p58 = scmp.eq.s32.totalorder %s20, 1
      %p59 = por %p57, %p58
      %p60 = scmp.ne.s32.totalorder %s51, %s52
      %p61 = scmp.eq.s32.totalorder %s20, 0
      %p62 = por %p60, %p61
      %p63 = scmp.ne.s32.totalorder %s51, %s52
      %p64 = scmp.eq.s32.totalorder %s21, 1
      %p65 = por %p63, %p64
      %p67 = scmp.ne.s32.totalorder %s52, %s66
      %p68 = scmp.eq.s32.totalorder %s21, 0
      %p69 = por %p67, %p68
      %s71 = sadd.s32 %s70, 1
      %p74 = scmp.eq.s32.totalorder %s15, 1
      %p75 = scmp.ne.s32.totalorder %s70, %s72
      %p76 = scmp.eq.s32.totalorder %s15, 0
      %p77 = por %p75, %p76
      %p78 = scmp.ne.s32.totalorder %s70, %s72
      %p79 = scmp.eq.s32.totalorder %s20, 1
      %p80 = por %p78, %p79
      %p81 = scmp.ne.s32.totalorder %s72, %s73
      %p82 = scmp.eq.s32.totalorder %s20, 0
      %p83 = por %p81, %p82
      %p84 = scmp.ne.s32.totalorder %s72, %s73
      %p85 = scmp.eq.s32.totalorder %s21, 1
      %p86 = por %p84, %p85
      %p88 = scmp.ne.s32.totalorder %s73, %s87
      %p89 = scmp.eq.s32.totalorder %s21, 0
      %p90 = por %p88, %p89
      %s92 = sadd.s32 %s91, 1
      %p95 = scmp.eq.s32.totalorder %s15, 1
      %p96 = scmp.ne.s32.totalorder %s91, %s93
      %p97 = scmp.eq.s32.totalorder %s15, 0
      %p98 = por %p96, %p97
      %p99 = scmp.ne.s32.totalorder %s91, %s93
      %p100 = scmp.eq.s32.totalorder %s20, 1
      %p101 = por %p99, %p100
      %p102 = scmp.ne.s32.totalorder %s93, %s94
      %p103 = scmp.eq.s32.totalorder %s20, 0
      %p104 = por %p102, %p103
      %p105 = scmp.ne.s32.totalorder %s93, %s94
      %p106 = scmp.eq.s32.totalorder %s21, 1
      %p107 = por %p105, %p106
      %p109 = scmp.ne.s32.totalorder %s94, %s108
      %p110 = scmp.eq.s32.totalorder %s21, 0
      %p111 = por %p109, %p110
      %s113 = sadd.s32 %s112, 1
      %p116 = scmp.eq.s32.totalorder %s15, 1
      %p117 = scmp.ne.s32.totalorder %s112, %s114
      %p118 = scmp.eq.s32.totalorder %s15, 0
      %p119 = por %p117, %p118
      %p120 = scmp.ne.s32.totalorder %s112, %s114
      %p121 = scmp.eq.s32.totalorder %s20, 1
      %p122 = por %p120, %p121
      %p123 = scmp.ne.s32.totalorder %s114, %s115
      %p124 = scmp.eq.s32.totalorder %s20, 0
      %p125 = por %p123, %p124
      %p126 = scmp.ne.s32.totalorder %s114, %s115
      %p127 = scmp.eq.s32.totalorder %s21, 1
      %p128 = por %p126, %p127
      %p130 = scmp.ne.s32.totalorder %s115, %s129
      %p131 = scmp.eq.s32.totalorder %s21, 0
      %p132 = por %p130, %p131
      %s134 = sadd.s32 %s133, 1
      %p137 = scmp.eq.s32.totalorder %s15, 1
      %p138 = scmp.ne.s32.totalorder %s133, %s135
      %p139 = scmp.eq.s32.totalorder %s15, 0
      %p140 = por %p138, %p139
      %p141 = scmp.ne.s32.totalorder %s133, %s135
      %p142 = scmp.eq.s32.totalorder %s20, 1
      %p143 = por %p141, %p142
      %p144 = scmp.ne.s32.totalorder %s135, %s136
      %p145 = scmp.eq.s32.totalorder %s20, 0
      %p146 = por %p144, %p145
      %p147 = scmp.ne.s32.totalorder %s135, %s136
      %p148 = scmp.eq.s32.totalorder %s21, 1
      %p149 = por %p147, %p148
      %p151 = scmp.ne.s32.totalorder %s136, %s150
      %p152 = scmp.eq.s32.totalorder %s21, 0
      %p153 = por %p151, %p152
      %s155 = sadd.s32 %s154, 1
      %p158 = scmp.eq.s32.totalorder %s15, 1
      %p159 = scmp.ne.s32.totalorder %s154, %s156
      %p160 = scmp.eq.s32.totalorder %s15, 0
      %p161 = por %p159, %p160
      %p162 = scmp.ne.s32.totalorder %s154, %s156
      %p163 = scmp.eq.s32.totalorder %s20, 1
      %p164 = por %p162, %p163
      %p165 = scmp.ne.s32.totalorder %s156, %s157
      %p166 = scmp.eq.s32.totalorder %s20, 0
      %p167 = por %p165, %p166
      %p168 = scmp.ne.s32.totalorder %s156, %s157
      %p169 = scmp.eq.s32.totalorder %s21, 1
      %p170 = por %p168, %p169
      %p172 = scmp.ne.s32.totalorder %s157, %s171
      %p173 = scmp.eq.s32.totalorder %s21, 0
      %p174 = por %p172, %p173
      %s175 = ssub.s32 %s15, %s22
      %p176 = scmp.eq.s32.totalorder %s175, 0
      %s178 = sadd.s32 %s177, 1
      %s179 = scalar_select %p176, %s177, %s178
      %p182 = pneg %p176
      %p183 = scmp.eq.s32.totalorder %s15, 1
      %p184 = por %p182, %p183
      %p185 = scmp.ne.s32.totalorder %s177, %s180
      %p186 = scmp.eq.s32.totalorder %s15, 0
      %p187 = por %p185, %p186
      %p188 = scmp.ne.s32.totalorder %s177, %s180
      %p189 = scmp.eq.s32.totalorder %s20, 1
      %p190 = por %p188, %p189
      %p191 = scmp.ne.s32.totalorder %s180, %s181
      %p192 = scmp.eq.s32.totalorder %s20, 0
      %p193 = por %p191, %p192
      %p194 = scmp.ne.s32.totalorder %s180, %s181
      %p195 = scmp.eq.s32.totalorder %s21, 1
      %p196 = por %p194, %p195
      %p198 = scmp.ne.s32.totalorder %s181, %s197
      %p199 = scmp.eq.s32.totalorder %s21, 0
      %p200 = por %p198, %p199
      %p201 = scmp.le.s32.totalorder 1, %s15
      %p202 = scmp.lt.s32.totalorder %s15, 3
      %p203 = pnand %p201, %p202
      %p204 = pneg %p203
      // Predicated region
      $region9: #{mlp_classifier_forward.1} parent=5 // pred_check
        _
      $region10: #{mlp_classifier_forward.1} parent=5 // pred_check_branch
        %206 = sbr.rel (%p203) target = $region12
      $region11: #{mlp_classifier_forward.1} parent=5 // pred_region
        %s207 = ssub.s32 %s15, 1
        // Predicated region
        $region13: #{mlp_classifier_forward.1} parent=11 // pred_check
          %p208 = pneg %p62
        $region14: #{mlp_classifier_forward.1} parent=11 // pred_check_branch
          %210 = sbr.rel (%p208) target = $region16
        $region15: #{mlp_classifier_forward.1} parent=11 // pred_region
          _
        $region16: #{mlp_classifier_forward.1} parent=11 // pred_fallthru
          _
        // Predicated region
        $region17: #{mlp_classifier_forward.1} parent=11 // pred_check
          %p211 = pneg %p83
        $region18: #{mlp_classifier_forward.1} parent=11 // pred_check_branch
          %213 = sbr.rel (%p211) target = $region20
        $region19: #{mlp_classifier_forward.1} parent=11 // pred_region
          _
        $region20: #{mlp_classifier_forward.1} parent=11 // pred_fallthru
          _
        // Predicated region
        $region21: #{mlp_classifier_forward.1} parent=11 // pred_check
          %p214 = pneg %p104
        $region22: #{mlp_classifier_forward.1} parent=11 // pred_check_branch
          %216 = sbr.rel (%p214) target = $region24
        $region23: #{mlp_classifier_forward.1} parent=11 // pred_region
          %s218 = ssub.s32 1024, 1024
          %219 = vsyncadd [#allocation3], %s218
          %s220 = sshll.u32 [#allocation2], 4
          %s221 = int_to_ptr.vmem [resolvable:$true] %s220
          %226 = dma.hbm_to_vmem [thread:$0]  %s3, 1024, %s221, [#allocation3], 64, 64, 4
        $region24: #{mlp_classifier_forward.1} parent=11 // pred_fallthru
          _
        // Predicated region
        $region25: #{mlp_classifier_forward.1} parent=11 // pred_check
          %p227 = pneg %p125
        $region26: #{mlp_classifier_forward.1} parent=11 // pred_check_branch
          %229 = sbr.rel (%p227) target = $region28
        $region27: #{mlp_classifier_forward.1} parent=11 // pred_region
          _
        $region28: #{mlp_classifier_forward.1} parent=11 // pred_fallthru
          _
        // Predicated region
        $region29: #{mlp_classifier_forward.1} parent=11 // pred_check
          %p230 = pneg %p146
        $region30: #{mlp_classifier_forward.1} parent=11 // pred_check_branch
          %232 = sbr.rel (%p230) target = $region32
        $region31: #{mlp_classifier_forward.1} parent=11 // pred_region
          %s234 = ssub.s32 1024, 1024
          %235 = vsyncadd [#allocation5], %s234
          %s236 = sshll.u32 [#allocation4], 4
          %s237 = int_to_ptr.vmem [resolvable:$true] %s236
          %242 = dma.hbm_to_vmem [thread:$0]  %s5, 1024, %s237, [#allocation5], 64, 64, 4
        $region32: #{mlp_classifier_forward.1} parent=11 // pred_fallthru
          _
        // Predicated region
        $region33: #{mlp_classifier_forward.1} parent=11 // pred_check
          %p243 = pneg %p167
        $region34: #{mlp_classifier_forward.1} parent=11 // pred_check_branch
          %245 = sbr.rel (%p243) target = $region36
        $region35: #{mlp_classifier_forward.1} parent=11 // pred_region
          _
        $region36: #{mlp_classifier_forward.1} parent=11 // pred_fallthru
          _
      $region12: #{mlp_classifier_forward.1} parent=5 // pred_fallthru
        _
      %p246 = scmp.lt.s32.totalorder %s15, 2
      // Predicated region
      $region37: #{mlp_classifier_forward.1} parent=5 // pred_check
        %p247 = pneg %p246
      $region38: #{mlp_classifier_forward.1} parent=5 // pred_check_branch
        %249 = sbr.rel (%p247) target = $region40
      $region39: #{mlp_classifier_forward.1} parent=5 // pred_region
        // Predicated region
        $region41: #{mlp_classifier_forward.1} parent=39 // pred_check
          %p250 = pneg %p35
        $region42: #{mlp_classifier_forward.1} parent=39 // pred_check_branch
          %252 = sbr.rel (%p250) target = $region44
        $region43: #{mlp_classifier_forward.1} parent=39 // pred_region
          %s253 = smul.u32 2, %s15
          %p254 = scmp.lt.s32.totalorder %s253, 3
          %s255 = scalar_select %p254, %s253, 3
          %s256 = smul.addr %s255, 4
          %s257 = scalar_lea.vmem %s0, %s256
          %s258 = smul.u32 2, %s15
        $region44: #{mlp_classifier_forward.1} parent=39 // pred_fallthru
          _
      $region40: #{mlp_classifier_forward.1} parent=5 // pred_fallthru
        _
      %p259 = scmp.le.s32.totalorder 1, %s15
      %p260 = scmp.lt.s32.totalorder %s15, 3
      %p261 = pnand %p259, %p260
      %p262 = pneg %p261
      // Predicated region
      $region45: #{mlp_classifier_forward.1} parent=5 // pred_check
        _
      $region46: #{mlp_classifier_forward.1} parent=5 // pred_check_branch
        %264 = sbr.rel (%p261) target = $region48
      $region47: #{mlp_classifier_forward.1} parent=5 // pred_region
        %s265 = ssub.s32 %s15, 1
        // Predicated region
        $region49: #{mlp_classifier_forward.1} parent=47 // pred_check
          %p266 = pneg %p104
        $region50: #{mlp_classifier_forward.1} parent=47 // pred_check_branch
          %268 = sbr.rel (%p266) target = $region52
        $region51: #{mlp_classifier_forward.1} parent=47 // pred_region
          %269 = dma.done [#allocation3], 1024
        $region52: #{mlp_classifier_forward.1} parent=47 // pred_fallthru
          _
        // Predicated region
        $region53: #{mlp_classifier_forward.1} parent=47 // pred_check
          %p270 = pneg %p146
        $region54: #{mlp_classifier_forward.1} parent=47 // pred_check_branch
          %272 = sbr.rel (%p270) target = $region56
        $region55: #{mlp_classifier_forward.1} parent=47 // pred_region
          %273 = dma.done [#allocation5], 1024
        $region56: #{mlp_classifier_forward.1} parent=47 // pred_fallthru
          _
        %s274 = smul.u32 2, %s20
        %p275 = scmp.lt.s32.totalorder %s274, 3
        %s276 = scalar_select %p275, %s274, 3
        %s277 = smul.addr %s276, 4
        %s278 = scalar_lea.vmem %s0, %s277
        %p279 = pneg %p41
        %p280 = pneg %p38
        %p281 = pneg %p62
        %p282 = pneg %p59
        %p283 = pneg %p83
        %p284 = pneg %p80
        %p285 = pneg %p104
        %p286 = pneg %p101
        %p287 = pneg %p125
        %p288 = pneg %p122
        %p289 = pneg %p146
        %p290 = pneg %p143
        %p291 = pneg %p167
        %p292 = pneg %p164
        %p293 = pneg %p193
        %p294 = pneg %p190
        %s295 = smul.u32 2, %s20
        %p296 = scmp.lt.s32.totalorder %s295, 3
        %s297 = scalar_select %p296, %s295, 3
        %s298 = smul.addr %s297, 8
        %s299 = scalar_lea.vmem %s7, %s298
        %s300 = smul.u32 2, %s20
        %p301 = scmp.lt.s32.totalorder %s300, 3
        %s302 = scalar_select %p301, %s300, 3
        %s303 = smul.addr %s302, 4
        %s304 = scalar_lea.vmem %s0, %s303
        %s305 = smul.u32 2, %s20
        %s306 = smul.u32 2, %s20
        %p307 = scmp.lt.s32.totalorder %s306, 3
        %s308 = scalar_select %p307, %s306, 3
        %s309 = smul.addr %s308, 8
        %s310 = scalar_lea.vmem %s7, %s309
        %s311 = smul.u32 2, %s20
        %v313 = vld [vmem:[%s304] sm:$0xf]
        %v314 = vld [vmem:[%s304 + $0x4] sm:$0xf]
        %v315 = vld [vmem:[%s1] sm:$0xf]
        %v316 = vld [vmem:[%s1 + $0x4] sm:$0xf]
        %v317 = vld [vmem:[%s1 + $0x8] sm:$0xf]
        %v318 = vld [vmem:[%s1 + $0xc] sm:$0xf]
        %v319 = vld [vmem:[%s1 + $0x10] sm:$0xf]
        %v320 = vld [vmem:[%s1 + $0x14] sm:$0xf]
        %v321 = vld [vmem:[%s1 + $0x18] sm:$0xf]
        %v322 = vld [vmem:[%s1 + $0x1c] sm:$0xf]
        %v323 = vld [vmem:[%s1 + $0x20] sm:$0xf]
        %v324 = vld [vmem:[%s1 + $0x24] sm:$0xf]
        %v325 = vld [vmem:[%s1 + $0x28] sm:$0xf]
        %v326 = vld [vmem:[%s1 + $0x2c] sm:$0xf]
        %v327 = vld [vmem:[%s1 + $0x30] sm:$0xf]
        %v328 = vld [vmem:[%s1 + $0x34] sm:$0xf]
        %v329 = vld [vmem:[%s1 + $0x38] sm:$0xf]
        %v330 = vld [vmem:[%s1 + $0x3c] sm:$0xf]
        %v331 = vld [vmem:[%s2] sm:$0x1]
        %v333 = vlaneseq
        %v334 = vshrl.u32 %v333, 7
        %v335 = vsub.s32 0, %v334
        %v336 = vrot.slane %v331, %v335
        %v340 = vunpack.c.l.b16 %v313
        %v341 = vunpack.c.l.b16 %v314
        %v342 = vpack.c.b16 %v341, %v340
        %v360 = vunpack.c.l.b16 %v315
        %v361 = vunpack.c.l.b16 %v316
        %v362 = vunpack.c.l.b16 %v317
        %v363 = vunpack.c.l.b16 %v318
        %v364 = vunpack.c.l.b16 %v319
        %v365 = vunpack.c.l.b16 %v320
        %v366 = vunpack.c.l.b16 %v321
        %v367 = vunpack.c.l.b16 %v322
        %v368 = vunpack.c.l.b16 %v323
        %v369 = vunpack.c.l.b16 %v324
        %v370 = vunpack.c.l.b16 %v325
        %v371 = vunpack.c.l.b16 %v326
        %v372 = vunpack.c.l.b16 %v327
        %v373 = vunpack.c.l.b16 %v328
        %v374 = vunpack.c.l.b16 %v329
        %v375 = vunpack.c.l.b16 %v330
        %v376 = vpack.c.b16 %v361, %v360
        %v377 = vpack.c.b16 %v363, %v362
        %v378 = vpack.c.b16 %v365, %v364
        %v379 = vpack.c.b16 %v367, %v366
        %v380 = vpack.c.b16 %v369, %v368
        %v381 = vpack.c.b16 %v371, %v370
        %v382 = vpack.c.b16 %v373, %v372
        %v383 = vpack.c.b16 %v375, %v374
        %392 = vmatprep.subr.bf16.mxu0 0
        %393 = vmatpush1.bf16.msra.mxu0 %v383
        %394 = vmatprep.subr.bf16.mxu0 0
        %395 = vmatpush1.bf16.msra.mxu0 %v382
        %396 = vmatprep.subr.bf16.mxu0 0
        %397 = vmatpush1.bf16.msra.mxu0 %v381
        %398 = vmatprep.subr.bf16.mxu0 0
        %399 = vmatpush1.bf16.msra.mxu0 %v380
        %400 = vmatprep.subr.bf16.mxu0 0
        %401 = vmatpush1.bf16.msra.mxu0 %v379
        %402 = vmatprep.subr.bf16.mxu0 0
        %403 = vmatpush1.bf16.msra.mxu0 %v378
        %404 = vmatprep.subr.bf16.mxu0 0
        %405 = vmatpush1.bf16.msra.mxu0 %v377
        %406 = vmatprep.subr.bf16.mxu0 0
        %407 = vmatpush1.bf16.msra.mxu0 %v376
        %408 = vmatprep.subr.bf16.mxu0 0
        %409 = vmatpush2.bf16.msra.mxu0 0
        %410 = vmatprep.subr.bf16.mxu0 0
        %411 = vmatpush2.bf16.msra.mxu0 0
        %412 = vmatprep.subr.bf16.mxu0 0
        %413 = vmatpush2.bf16.msra.mxu0 0
        %414 = vmatprep.subr.bf16.mxu0 0
        %415 = vmatpush2.bf16.msra.mxu0 0
        %416 = vmatprep.subr.bf16.mxu0 0
        %417 = vmatpush2.bf16.msra.mxu0 0
        %418 = vmatprep.subr.bf16.mxu0 0
        %419 = vmatpush2.bf16.msra.mxu0 0
        %420 = vmatprep.subr.bf16.mxu0 0
        %421 = vmatpush2.bf16.msra.mxu0 0
        %422 = vmatprep.subr.bf16.mxu0 0
        %423 = vmatpush2.bf16.msra.mxu0 0
        %424 = vmatprep.mubr.bf16.mxu0 0
        %425 = vmatmul.mubr.bf16.gmra.mxu0 %v342
        %v426 = vpop.f32.mrf.mxu0
        %v427 = vadd.f32 %v336, %v426
        %v428 = vpop.f32.mrf.mxu0
        %v429 = vpop.f32.mrf.mxu0
        %v430 = vadd.f32 %v336, %v429
        %v431 = vpop.f32.mrf.mxu0
        %432 = vdwg.mxu0
        %v433 = vmax.f32 %v427, 0.0
        %v434 = vmax.f32 %v430, 0.0
        %v435 = vpack.c.bf16 %v434, %v433
        %v436 = vld [vmem:[#allocation2] sm:$0xf]
        %v437 = vld [vmem:[#allocation2 + $0x4] sm:$0xf]
        %v438 = vld [vmem:[#allocation2 + $0x8] sm:$0xf]
        %v439 = vld [vmem:[#allocation2 + $0xc] sm:$0xf]
        %v440 = vld [vmem:[#allocation2 + $0x10] sm:$0xf]
        %v441 = vld [vmem:[#allocation2 + $0x14] sm:$0xf]
        %v442 = vld [vmem:[#allocation2 + $0x18] sm:$0xf]
        %v443 = vld [vmem:[#allocation2 + $0x1c] sm:$0xf]
        %v444 = vld [vmem:[#allocation2 + $0x20] sm:$0xf]
        %v445 = vld [vmem:[#allocation2 + $0x24] sm:$0xf]
        %v446 = vld [vmem:[#allocation2 + $0x28] sm:$0xf]
        %v447 = vld [vmem:[#allocation2 + $0x2c] sm:$0xf]
        %v448 = vld [vmem:[#allocation2 + $0x30] sm:$0xf]
        %v449 = vld [vmem:[#allocation2 + $0x34] sm:$0xf]
        %v450 = vld [vmem:[#allocation2 + $0x38] sm:$0xf]
        %v451 = vld [vmem:[#allocation2 + $0x3c] sm:$0xf]
        %v452 = vld [vmem:[%s4] sm:$0x1]
        %v454 = vlaneseq
        %v455 = vshrl.u32 %v454, 7
        %v456 = vsub.s32 0, %v455
        %v457 = vrot.slane %v452, %v456
        %v475 = vunpack.c.l.b16 %v436
        %v476 = vunpack.c.l.b16 %v437
        %v477 = vunpack.c.l.b16 %v438
        %v478 = vunpack.c.l.b16 %v439
        %v479 = vunpack.c.l.b16 %v440
        %v480 = vunpack.c.l.b16 %v441
        %v481 = vunpack.c.l.b16 %v442
        %v482 = vunpack.c.l.b16 %v443
        %v483 = vunpack.c.l.b16 %v444
        %v484 = vunpack.c.l.b16 %v445
        %v485 = vunpack.c.l.b16 %v446
        %v486 = vunpack.c.l.b16 %v447
        %v487 = vunpack.c.l.b16 %v448
        %v488 = vunpack.c.l.b16 %v449
        %v489 = vunpack.c.l.b16 %v450
        %v490 = vunpack.c.l.b16 %v451
        %v491 = vpack.c.b16 %v476, %v475
        %v492 = vpack.c.b16 %v478, %v477
        %v493 = vpack.c.b16 %v480, %v479
        %v494 = vpack.c.b16 %v482, %v481
        %v495 = vpack.c.b16 %v484, %v483
        %v496 = vpack.c.b16 %v486, %v485
        %v497 = vpack.c.b16 %v488, %v487
        %v498 = vpack.c.b16 %v490, %v489
        %507 = vmatprep.subr.bf16.mxu0 0
        %508 = vmatpush1.bf16.msra.mxu0 %v498
        %509 = vmatprep.subr.bf16.mxu0 0
        %510 = vmatpush1.bf16.msra.mxu0 %v497
        %511 = vmatprep.subr.bf16.mxu0 0
        %512 = vmatpush1.bf16.msra.mxu0 %v496
        %513 = vmatprep.subr.bf16.mxu0 0
        %514 = vmatpush1.bf16.msra.mxu0 %v495
        %515 = vmatprep.subr.bf16.mxu0 0
        %516 = vmatpush1.bf16.msra.mxu0 %v494
        %517 = vmatprep.subr.bf16.mxu0 0
        %518 = vmatpush1.bf16.msra.mxu0 %v493
        %519 = vmatprep.subr.bf16.mxu0 0
        %520 = vmatpush1.bf16.msra.mxu0 %v492
        %521 = vmatprep.subr.bf16.mxu0 0
        %522 = vmatpush1.bf16.msra.mxu0 %v491
        %523 = vmatprep.subr.bf16.mxu0 0
        %524 = vmatpush2.bf16.msra.mxu0 0
        %525 = vmatprep.subr.bf16.mxu0 0
        %526 = vmatpush2.bf16.msra.mxu0 0
        %527 = vmatprep.subr.bf16.mxu0 0
        %528 = vmatpush2.bf16.msra.mxu0 0
        %529 = vmatprep.subr.bf16.mxu0 0
        %530 = vmatpush2.bf16.msra.mxu0 0
        %531 = vmatprep.subr.bf16.mxu0 0
        %532 = vmatpush2.bf16.msra.mxu0 0
        %533 = vmatprep.subr.bf16.mxu0 0
        %534 = vmatpush2.bf16.msra.mxu0 0
        %535 = vmatprep.subr.bf16.mxu0 0
        %536 = vmatpush2.bf16.msra.mxu0 0
        %537 = vmatprep.subr.bf16.mxu0 0
        %538 = vmatpush2.bf16.msra.mxu0 0
        %539 = vmatprep.mubr.bf16.mxu0 0
        %540 = vmatmul.mubr.bf16.gmra.mxu0 %v435
        %v541 = vpop.f32.mrf.mxu0
        %v542 = vadd.f32 %v457, %v541
        %v543 = vpop.f32.mrf.mxu0
        %v544 = vpop.f32.mrf.mxu0
        %v545 = vadd.f32 %v457, %v544
        %v546 = vpop.f32.mrf.mxu0
        %547 = vdwg.mxu0
        %v548 = vmax.f32 %v542, 0.0
        %v549 = vmax.f32 %v545, 0.0
        %v550 = vpack.c.bf16 %v549, %v548
        %v551 = vld [vmem:[#allocation4] sm:$0xf]
        %v552 = vld [vmem:[#allocation4 + $0x4] sm:$0xf]
        %v553 = vld [vmem:[#allocation4 + $0x8] sm:$0xf]
        %v554 = vld [vmem:[#allocation4 + $0xc] sm:$0xf]
        %v555 = vld [vmem:[#allocation4 + $0x10] sm:$0xf]
        %v556 = vld [vmem:[#allocation4 + $0x14] sm:$0xf]
        %v557 = vld [vmem:[#allocation4 + $0x18] sm:$0xf]
        %v558 = vld [vmem:[#allocation4 + $0x1c] sm:$0xf]
        %v559 = vld [vmem:[#allocation4 + $0x20] sm:$0xf]
        %v560 = vld [vmem:[#allocation4 + $0x24] sm:$0xf]
        %v561 = vld [vmem:[#allocation4 + $0x28] sm:$0xf]
        %v562 = vld [vmem:[#allocation4 + $0x2c] sm:$0xf]
        %v563 = vld [vmem:[#allocation4 + $0x30] sm:$0xf]
        %v564 = vld [vmem:[#allocation4 + $0x34] sm:$0xf]
        %v565 = vld [vmem:[#allocation4 + $0x38] sm:$0xf]
        %v566 = vld [vmem:[#allocation4 + $0x3c] sm:$0xf]
        %v567 = vld [vmem:[%s6] sm:$0x1]
        %v569 = vlaneseq
        %v570 = vshrl.u32 %v569, 7
        %v571 = vsub.s32 0, %v570
        %v572 = vrot.slane %v567, %v571
        %v590 = vunpack.c.l.b16 %v551
        %v591 = vunpack.c.l.b16 %v552
        %v592 = vunpack.c.l.b16 %v553
        %v593 = vunpack.c.l.b16 %v554
        %v594 = vunpack.c.l.b16 %v555
        %v595 = vunpack.c.l.b16 %v556
        %v596 = vunpack.c.l.b16 %v557
        %v597 = vunpack.c.l.b16 %v558
        %v598 = vunpack.c.l.b16 %v559
        %v599 = vunpack.c.l.b16 %v560
        %v600 = vunpack.c.l.b16 %v561
        %v601 = vunpack.c.l.b16 %v562
        %v602 = vunpack.c.l.b16 %v563
        %v603 = vunpack.c.l.b16 %v564
        %v604 = vunpack.c.l.b16 %v565
        %v605 = vunpack.c.l.b16 %v566
        %v606 = vpack.c.b16 %v591, %v590
        %v607 = vpack.c.b16 %v593, %v592
        %v608 = vpack.c.b16 %v595, %v594
        %v609 = vpack.c.b16 %v597, %v596
        %v610 = vpack.c.b16 %v599, %v598
        %v611 = vpack.c.b16 %v601, %v600
        %v612 = vpack.c.b16 %v603, %v602
        %v613 = vpack.c.b16 %v605, %v604
        %622 = vmatprep.subr.bf16.mxu0 0
        %623 = vmatpush1.bf16.msra.mxu0 %v613
        %624 = vmatprep.subr.bf16.mxu0 0
        %625 = vmatpush1.bf16.msra.mxu0 %v612
        %626 = vmatprep.subr.bf16.mxu0 0
        %627 = vmatpush1.bf16.msra.mxu0 %v611
        %628 = vmatprep.subr.bf16.mxu0 0
        %629 = vmatpush1.bf16.msra.mxu0 %v610
        %630 = vmatprep.subr.bf16.mxu0 0
        %631 = vmatpush1.bf16.msra.mxu0 %v609
        %632 = vmatprep.subr.bf16.mxu0 0
        %633 = vmatpush1.bf16.msra.mxu0 %v608
        %634 = vmatprep.subr.bf16.mxu0 0
        %635 = vmatpush1.bf16.msra.mxu0 %v607
        %636 = vmatprep.subr.bf16.mxu0 0
        %637 = vmatpush1.bf16.msra.mxu0 %v606
        %638 = vmatprep.subr.bf16.mxu0 0
        %639 = vmatpush2.bf16.msra.mxu0 0
        %640 = vmatprep.subr.bf16.mxu0 0
        %641 = vmatpush2.bf16.msra.mxu0 0
        %642 = vmatprep.subr.bf16.mxu0 0
        %643 = vmatpush2.bf16.msra.mxu0 0
        %644 = vmatprep.subr.bf16.mxu0 0
        %645 = vmatpush2.bf16.msra.mxu0 0
        %646 = vmatprep.subr.bf16.mxu0 0
        %647 = vmatpush2.bf16.msra.mxu0 0
        %648 = vmatprep.subr.bf16.mxu0 0
        %649 = vmatpush2.bf16.msra.mxu0 0
        %650 = vmatprep.subr.bf16.mxu0 0
        %651 = vmatpush2.bf16.msra.mxu0 0
        %652 = vmatprep.subr.bf16.mxu0 0
        %653 = vmatpush2.bf16.msra.mxu0 0
        %654 = vmatprep.mubr.bf16.mxu0 0
        %655 = vmatmul.mubr.bf16.gmra.mxu0 %v550
        %v656 = vpop.f32.mrf.mxu0
        %v657 = vadd.f32 %v572, %v656
        %v658 = vpop.f32.mrf.mxu0
        %v659 = vpop.f32.mrf.mxu0
        %v660 = vadd.f32 %v572, %v659
        %v661 = vpop.f32.mrf.mxu0
        %662 = vdwg.mxu0
        %663 = vst [vmem:[%s310] sm:$0xff] %v657
        %664 = vst [vmem:[%s310 + $0x8] sm:$0xff] %v660
        %s665 = smul.u32 2, %s20
        %p666 = scmp.lt.s32.totalorder %s665, 3
        %s667 = scalar_select %p666, %s665, 3
        %s668 = smul.addr %s667, 8
        %s669 = scalar_lea.vmem %s7, %s668
        // Predicated region
        $region57: #{mlp_classifier_forward.1} parent=47 // pred_check
          %p670 = pneg %p190
        $region58: #{mlp_classifier_forward.1} parent=47 // pred_check_branch
          %672 = sbr.rel (%p670) target = $region60
        $region59: #{mlp_classifier_forward.1} parent=47 // pred_region
          %s673 = smul.u32 2, %s20
        $region60: #{mlp_classifier_forward.1} parent=47 // pred_fallthru
          _
      $region48: #{mlp_classifier_forward.1} parent=5 // pred_fallthru
        _
      %p674 = scmp.le.s32.totalorder 2, %s15
      // Predicated region
      $region61: #{mlp_classifier_forward.1} parent=5 // pred_check
        %p675 = pneg %p674
      $region62: #{mlp_classifier_forward.1} parent=5 // pred_check_branch
        %677 = sbr.rel (%p675) target = $region64
      $region63: #{mlp_classifier_forward.1} parent=5 // pred_region
        %s678 = ssub.s32 %s15, 2
        // Predicated region
        $region65: #{mlp_classifier_forward.1} parent=63 // pred_check
          %p679 = pneg %p196
        $region66: #{mlp_classifier_forward.1} parent=63 // pred_check_branch
          %681 = sbr.rel (%p679) target = $region68
        $region67: #{mlp_classifier_forward.1} parent=63 // pred_region
          %s682 = smul.u32 2, %s21
          %p683 = scmp.lt.s32.totalorder %s682, 3
          %s684 = scalar_select %p683, %s682, 3
          %s685 = smul.addr %s684, 8
          %s686 = scalar_lea.vmem %s7, %s685
        $region68: #{mlp_classifier_forward.1} parent=63 // pred_fallthru
          _
      $region64: #{mlp_classifier_forward.1} parent=5 // pred_fallthru
        _
    $region6: #{mlp_classifier_forward.1} parent=1 // loop_footer
      %s19 = sadd.s32 1, %s15
    $region7: #{mlp_classifier_forward.1} parent=1 // loop_footer_branch
      %14 = sbr.rel target = $region3
    $region8: #{mlp_classifier_forward.1} parent=1 // loop_exit
      _
    %687 = vsyncpa [#allocation3], 1
    %s688 = scalar_lea.sflag [#allocation3], 1
    %689 = vsyncpa %s688, 1
    %690 = vsyncpa [#allocation5], 1

// kernel: mlp_classifier_forward.1
$region0: #{mlp_classifier_forward.1}
  #allocation0 [shape = 'u32[]', space=smem, size = 0x4, offset = 0x4, fixed_abs, tag = 'smem constant byte address 0x4 - core index']
  #allocation1 [shape = 'u32[144,128]{1,0:T(1,128)}', space=vmem, size = 0x12000, scoped, tag = 'internal scratch']
  %s0 = inlined_call_operand.vmem [shape: bf16[32,128], index: 0, kind: input, shape index: {}]
  %s1 = inlined_call_operand.vmem [shape: bf16[128,128], index: 1, kind: input, shape index: {}]
  %s2 = inlined_call_operand.vmem [shape: f32[1,128], index: 2, kind: input, shape index: {}]
  %s3 = inlined_call_operand.hbm [shape: bf16[128,128], index: 3, kind: input, shape index: {}]
  %s4 = inlined_call_operand.vmem [shape: f32[1,128], index: 4, kind: input, shape index: {}]
  %s5 = inlined_call_operand.hbm [shape: bf16[128,128], index: 5, kind: input, shape index: {}]
  %s6 = inlined_call_operand.vmem [shape: f32[1,128], index: 6, kind: input, shape index: {}]
  %s7 = inlined_call_operand.vmem [shape: f32[32,128], index: 7, kind: output, shape index: {}]
  %s8 = sld [smem:[#allocation0]]
  $region69: #{mlp_classifier_forward.1} parent=0
    _
  %s10 = ssub.s32 1, %s8
  %s11 = scalar_select 0, %s10, %s8
  $region1: #{mlp_classifier_forward.1} parent=0
    #allocation2 [shape = 'u8[32768]{0}', space=vmem, size = 0x8000, scoped, tag = 'input window, operand 3, single buffered']
    #allocation3 [shape = 's32[2]{0}', space=sflag, size = 0x8, scoped, tag = 'scoped memory for mlp_classifier_forward.1']
    #allocation4 [shape = 'u8[32768]{0}', space=vmem, size = 0x8000, scoped, tag = 'input window, operand 5, single buffered']
    #allocation5 [shape = 's32[1]{0}', space=sflag, size = 0x4, scoped, tag = 'scoped memory for mlp_classifier_forward.1']
    %12 = vsyncpa [#allocation3], 0
    %13 = vsyncpa [#allocation5], 0
    loop: start=0, step=1, limit=4
    $region2: #{mlp_classifier_forward.1} parent=1 // loop_pre_header
      _
    $region3: #{mlp_classifier_forward.1} parent=1 // loop_header
      %s15 = sphi 0, %s19
      %p16 = scmp.ge.s32.totalorder %s15, 4
      %s25 = sphi 0, %s27
      %s28 = sphi 0, %s25
      %s29 = sphi 0, %s28
      %s45 = sphi 0, %s29
      %s49 = sphi 0, %s49
      %s51 = sphi 0, %s49
      %s52 = sphi 0, %s51
      %s66 = sphi 0, %s52
      %s70 = sphi 0, %s70
      %s72 = sphi 0, %s70
      %s73 = sphi 0, %s72
      %s87 = sphi 0, %s73
      %s91 = sphi 0, %s91
      %s93 = sphi 0, %s91
      %s94 = sphi 0, %s93
      %s108 = sphi 0, %s94
      %s112 = sphi 0, %s112
      %s114 = sphi 0, %s112
      %s115 = sphi 0, %s114
      %s129 = sphi 0, %s115
      %s133 = sphi 0, %s133
      %s135 = sphi 0, %s133
      %s136 = sphi 0, %s135
      %s150 = sphi 0, %s136
      %s154 = sphi 0, %s154
      %s156 = sphi 0, %s154
      %s157 = sphi 0, %s156
      %s171 = sphi 0, %s157
      %s177 = sphi 0, %s179
      %s180 = sphi 0, %s177
      %s181 = sphi 0, %s180
      %s197 = sphi 0, %s181
    $region4: #{mlp_classifier_forward.1} parent=1 // loop_header_branch
      %18 = sbr.rel (%p16) target = $region8
    $region5: #{mlp_classifier_forward.1} parent=1 // loop_body
      %s20 = ssub.s32 %s15, 1
      %s21 = ssub.s32 %s15, 2
      %s22 = sadd.s32 %s15, 1
      %s23 = ssub.s32 %s15, %s22
      %p24 = scmp.eq.s32.totalorder %s23, 0
      %s26 = sadd.s32 %s25, 1
      %s27 = scalar_select %p24, %s25, %s26
      %p30 = pneg %p24
      %p31 = scmp.eq.s32.totalorder %s15, 1
      %p32 = por %p30, %p31
      %p33 = scmp.ne.s32.totalorder %s25, %s28
      %p34 = scmp.eq.s32.totalorder %s15, 0
      %p35 = por %p33, %p34
      %p36 = scmp.ne.s32.totalorder %s25, %s28
      %p37 = scmp.eq.s32.totalorder %s20, 1
      %p38 = por %p36, %p37
      %p39 = scmp.ne.s32.totalorder %s28, %s29
      %p40 = scmp.eq.s32.totalorder %s20, 0
      %p41 = por %p39, %p40
      %p42 = scmp.ne.s32.totalorder %s28, %s29
      %p43 = scmp.eq.s32.totalorder %s21, 1
      %p44 = por %p42, %p43
      %p46 = scmp.ne.s32.totalorder %s29, %s45
      %p47 = scmp.eq.s32.totalorder %s21, 0
      %p48 = por %p46, %p47
      %s50 = sadd.s32 %s49, 1
      %p53 = scmp.eq.s32.totalorder %s15, 1
      %p54 = scmp.ne.s32.totalorder %s49, %s51
      %p55 = scmp.eq.s32.totalorder %s15, 0
      %p56 = por %p54, %p55
      %p57 = scmp.ne.s32.totalorder %s49, %s51
      %p58 = scmp.eq.s32.totalorder %s20, 1
      %p59 = por %p57, %p58
      %p60 = scmp.ne.s32.totalorder %s51, %s52
      %p61 = scmp.eq.s32.totalorder %s20, 0
      %p62 = por %p60, %p61
      %p63 = scmp.ne.s32.totalorder %s51, %s52
      %p64 = scmp.eq.s32.totalorder %s21, 1
      %p65 = por %p63, %p64
      %p67 = scmp.ne.s32.totalorder %s52, %s66
      %p68 = scmp.eq.s32.totalorder %s21, 0
      %p69 = por %p67, %p68
      %s71 = sadd.s32 %s70, 1
      %p74 = scmp.eq.s32.totalorder %s15, 1
      %p75 = scmp.ne.s32.totalorder %s70, %s72
      %p76 = scmp.eq.s32.totalorder %s15, 0
      %p77 = por %p75, %p76
      %p78 = scmp.ne.s32.totalorder %s70, %s72
      %p79 = scmp.eq.s32.totalorder %s20, 1
      %p80 = por %p78, %p79
      %p81 = scmp.ne.s32.totalorder %s72, %s73
      %p82 = scmp.eq.s32.totalorder %s20, 0
      %p83 = por %p81, %p82
      %p84 = scmp.ne.s32.totalorder %s72, %s73
      %p85 = scmp.eq.s32.totalorder %s21, 1
      %p86 = por %p84, %p85
      %p88 = scmp.ne.s32.totalorder %s73, %s87
      %p89 = scmp.eq.s32.totalorder %s21, 0
      %p90 = por %p88, %p89
      %s92 = sadd.s32 %s91, 1
      %p95 = scmp.eq.s32.totalorder %s15, 1
      %p96 = scmp.ne.s32.totalorder %s91, %s93
      %p97 = scmp.eq.s32.totalorder %s15, 0
      %p98 = por %p96, %p97
      %p99 = scmp.ne.s32.totalorder %s91, %s93
      %p100 = scmp.eq.s32.totalorder %s20, 1
      %p101 = por %p99, %p100
      %p102 = scmp.ne.s32.totalorder %s93, %s94
      %p103 = scmp.eq.s32.totalorder %s20, 0
      %p104 = por %p102, %p103
      %p105 = scmp.ne.s32.totalorder %s93, %s94
      %p106 = scmp.eq.s32.totalorder %s21, 1
      %p107 = por %p105, %p106
      %p109 = scmp.ne.s32.totalorder %s94, %s108
      %p110 = scmp.eq.s32.totalorder %s21, 0
      %p111 = por %p109, %p110
      %s113 = sadd.s32 %s112, 1
      %p116 = scmp.eq.s32.totalorder %s15, 1
      %p117 = scmp.ne.s32.totalorder %s112, %s114
      %p118 = scmp.eq.s32.totalorder %s15, 0
      %p119 = por %p117, %p118
      %p120 = scmp.ne.s32.totalorder %s112, %s114
      %p121 = scmp.eq.s32.totalorder %s20, 1
      %p122 = por %p120, %p121
      %p123 = scmp.ne.s32.totalorder %s114, %s115
      %p124 = scmp.eq.s32.totalorder %s20, 0
      %p125 = por %p123, %p124
      %p126 = scmp.ne.s32.totalorder %s114, %s115
      %p127 = scmp.eq.s32.totalorder %s21, 1
      %p128 = por %p126, %p127
      %p130 = scmp.ne.s32.totalorder %s115, %s129
      %p131 = scmp.eq.s32.totalorder %s21, 0
      %p132 = por %p130, %p131
      %s134 = sadd.s32 %s133, 1
      %p137 = scmp.eq.s32.totalorder %s15, 1
      %p138 = scmp.ne.s32.totalorder %s133, %s135
      %p139 = scmp.eq.s32.totalorder %s15, 0
      %p140 = por %p138, %p139
      %p141 = scmp.ne.s32.totalorder %s133, %s135
      %p142 = scmp.eq.s32.totalorder %s20, 1
      %p143 = por %p141, %p142
      %p144 = scmp.ne.s32.totalorder %s135, %s136
      %p145 = scmp.eq.s32.totalorder %s20, 0
      %p146 = por %p144, %p145
      %p147 = scmp.ne.s32.totalorder %s135, %s136
      %p148 = scmp.eq.s32.totalorder %s21, 1
      %p149 = por %p147, %p148
      %p151 = scmp.ne.s32.totalorder %s136, %s150
      %p152 = scmp.eq.s32.totalorder %s21, 0
      %p153 = por %p151, %p152
      %s155 = sadd.s32 %s154, 1
      %p158 = scmp.eq.s32.totalorder %s15, 1
      %p159 = scmp.ne.s32.totalorder %s154, %s156
      %p160 = scmp.eq.s32.totalorder %s15, 0
      %p161 = por %p159, %p160
      %p162 = scmp.ne.s32.totalorder %s154, %s156
      %p163 = scmp.eq.s32.totalorder %s20, 1
      %p164 = por %p162, %p163
      %p165 = scmp.ne.s32.totalorder %s156, %s157
      %p166 = scmp.eq.s32.totalorder %s20, 0
      %p167 = por %p165, %p166
      %p168 = scmp.ne.s32.totalorder %s156, %s157
      %p169 = scmp.eq.s32.totalorder %s21, 1
      %p170 = por %p168, %p169
      %p172 = scmp.ne.s32.totalorder %s157, %s171
      %p173 = scmp.eq.s32.totalorder %s21, 0
      %p174 = por %p172, %p173
      %s175 = ssub.s32 %s15, %s22
      %p176 = scmp.eq.s32.totalorder %s175, 0
      %s178 = sadd.s32 %s177, 1
      %s179 = scalar_select %p176, %s177, %s178
      %p182 = pneg %p176
      %p183 = scmp.eq.s32.totalorder %s15, 1
      %p184 = por %p182, %p183
      %p185 = scmp.ne.s32.totalorder %s177, %s180
      %p186 = scmp.eq.s32.totalorder %s15, 0
      %p187 = por %p185, %p186
      %p188 = scmp.ne.s32.totalorder %s177, %s180
      %p189 = scmp.eq.s32.totalorder %s20, 1
      %p190 = por %p188, %p189
      %p191 = scmp.ne.s32.totalorder %s180, %s181
      %p192 = scmp.eq.s32.totalorder %s20, 0
      %p193 = por %p191, %p192
      %p194 = scmp.ne.s32.totalorder %s180, %s181
      %p195 = scmp.eq.s32.totalorder %s21, 1
      %p196 = por %p194, %p195
      %p198 = scmp.ne.s32.totalorder %s181, %s197
      %p199 = scmp.eq.s32.totalorder %s21, 0
      %p200 = por %p198, %p199
      %p201 = scmp.le.s32.totalorder 1, %s15
      %p202 = scmp.lt.s32.totalorder %s15, 3
      %p203 = pnand %p201, %p202
      %p204 = pneg %p203
      // Predicated region
      $region9: #{mlp_classifier_forward.1} parent=5 // pred_check
        _
      $region10: #{mlp_classifier_forward.1} parent=5 // pred_check_branch
        %206 = sbr.rel (%p203) target = $region12
      $region11: #{mlp_classifier_forward.1} parent=5 // pred_region
        %s207 = ssub.s32 %s15, 1
        // Predicated region
        $region13: #{mlp_classifier_forward.1} parent=11 // pred_check
          %p208 = pneg %p62
        $region14: #{mlp_classifier_forward.1} parent=11 // pred_check_branch
          %210 = sbr.rel (%p208) target = $region16
        $region15: #{mlp_classifier_forward.1} parent=11 // pred_region
          _
        $region16: #{mlp_classifier_forward.1} parent=11 // pred_fallthru
          _
        // Predicated region
        $region17: #{mlp_classifier_forward.1} parent=11 // pred_check
          %p211 = pneg %p83
        $region18: #{mlp_classifier_forward.1} parent=11 // pred_check_branch
          %213 = sbr.rel (%p211) target = $region20
        $region19: #{mlp_classifier_forward.1} parent=11 // pred_region
          _
        $region20: #{mlp_classifier_forward.1} parent=11 // pred_fallthru
          _
        // Predicated region
        $region21: #{mlp_classifier_forward.1} parent=11 // pred_check
          %p214 = pneg %p104
        $region22: #{mlp_classifier_forward.1} parent=11 // pred_check_branch
          %216 = sbr.rel (%p214) target = $region24
        $region23: #{mlp_classifier_forward.1} parent=11 // pred_region
          %s218 = ssub.s32 1024, 1024
          %219 = vsyncadd [#allocation3], %s218
          %s220 = sshll.u32 [#allocation2], 4
          %s221 = int_to_ptr.vmem [resolvable:$true] %s220
          %226 = dma.hbm_to_vmem [thread:$0]  %s3, 1024, %s221, [#allocation3], 64, 64, 4
        $region24: #{mlp_classifier_forward.1} parent=11 // pred_fallthru
          _
        // Predicated region
        $region25: #{mlp_classifier_forward.1} parent=11 // pred_check
          %p227 = pneg %p125
        $region26: #{mlp_classifier_forward.1} parent=11 // pred_check_branch
          %229 = sbr.rel (%p227) target = $region28
        $region27: #{mlp_classifier_forward.1} parent=11 // pred_region
          _
        $region28: #{mlp_classifier_forward.1} parent=11 // pred_fallthru
          _
        // Predicated region
        $region29: #{mlp_classifier_forward.1} parent=11 // pred_check
          %p230 = pneg %p146
        $region30: #{mlp_classifier_forward.1} parent=11 // pred_check_branch
          %232 = sbr.rel (%p230) target = $region32
        $region31: #{mlp_classifier_forward.1} parent=11 // pred_region
          %s234 = ssub.s32 1024, 1024
          %235 = vsyncadd [#allocation5], %s234
          %s236 = sshll.u32 [#allocation4], 4
          %s237 = int_to_ptr.vmem [resolvable:$true] %s236
          %242 = dma.hbm_to_vmem [thread:$0]  %s5, 1024, %s237, [#allocation5], 64, 64, 4
        $region32: #{mlp_classifier_forward.1} parent=11 // pred_fallthru
          _
        // Predicated region
        $region33: #{mlp_classifier_forward.1} parent=11 // pred_check
          %p243 = pneg %p167
        $region34: #{mlp_classifier_forward.1} parent=11 // pred_check_branch
          %245 = sbr.rel (%p243) target = $region36
        $region35: #{mlp_classifier_forward.1} parent=11 // pred_region
          _
        $region36: #{mlp_classifier_forward.1} parent=11 // pred_fallthru
          _
      $region12: #{mlp_classifier_forward.1} parent=5 // pred_fallthru
        _
      %p246 = scmp.lt.s32.totalorder %s15, 2
      // Predicated region
      $region37: #{mlp_classifier_forward.1} parent=5 // pred_check
        %p247 = pneg %p246
      $region38: #{mlp_classifier_forward.1} parent=5 // pred_check_branch
        %249 = sbr.rel (%p247) target = $region40
      $region39: #{mlp_classifier_forward.1} parent=5 // pred_region
        // Predicated region
        $region41: #{mlp_classifier_forward.1} parent=39 // pred_check
          %p250 = pneg %p35
        $region42: #{mlp_classifier_forward.1} parent=39 // pred_check_branch
          %252 = sbr.rel (%p250) target = $region44
        $region43: #{mlp_classifier_forward.1} parent=39 // pred_region
          %s253 = smul.u32 2, %s15
          %p254 = scmp.lt.s32.totalorder %s253, 3
          %s255 = scalar_select %p254, %s253, 3
          %s256 = smul.addr %s255, 4
          %s257 = scalar_lea.vmem %s0, %s256
          %s258 = smul.u32 2, %s15
        $region44: #{mlp_classifier_forward.1} parent=39 // pred_fallthru
          _
      $region40: #{mlp_classifier_forward.1} parent=5 // pred_fallthru
        _
      %p259 = scmp.le.s32.totalorder 1, %s15
      %p260 = scmp.lt.s32.totalorder %s15, 3
      %p261 = pnand %p259, %p260
      %p262 = pneg %p261
      // Predicated region
      $region45: #{mlp_classifier_forward.1} parent=5 // pred_check
        _
      $region46: #{mlp_classifier_forward.1} parent=5 // pred_check_branch
        %264 = sbr.rel (%p261) target = $region48
      $region47: #{mlp_classifier_forward.1} parent=5 // pred_region
        %s265 = ssub.s32 %s15, 1
        // Predicated region
        $region49: #{mlp_classifier_forward.1} parent=47 // pred_check
          %p266 = pneg %p104
        $region50: #{mlp_classifier_forward.1} parent=47 // pred_check_branch
          %268 = sbr.rel (%p266) target = $region52
        $region51: #{mlp_classifier_forward.1} parent=47 // pred_region
          %269 = dma.done [#allocation3], 1024
        $region52: #{mlp_classifier_forward.1} parent=47 // pred_fallthru
          _
        // Predicated region
        $region53: #{mlp_classifier_forward.1} parent=47 // pred_check
          %p270 = pneg %p146
        $region54: #{mlp_classifier_forward.1} parent=47 // pred_check_branch
          %272 = sbr.rel (%p270) target = $region56
        $region55: #{mlp_classifier_forward.1} parent=47 // pred_region
          %273 = dma.done [#allocation5], 1024
        $region56: #{mlp_classifier_forward.1} parent=47 // pred_fallthru
          _
        %s274 = smul.u32 2, %s20
        %p275 = scmp.lt.s32.totalorder %s274, 3
        %s276 = scalar_select %p275, %s274, 3
        %s277 = smul.addr %s276, 4
        %s278 = scalar_lea.vmem %s0, %s277
        %p279 = pneg %p41
        %p280 = pneg %p38
        %p281 = pneg %p62
        %p282 = pneg %p59
        %p283 = pneg %p83
        %p284 = pneg %p80
        %p285 = pneg %p104
        %p286 = pneg %p101
        %p287 = pneg %p125
        %p288 = pneg %p122
        %p289 = pneg %p146
        %p290 = pneg %p143
        %p291 = pneg %p167
        %p292 = pneg %p164
        %p293 = pneg %p193
        %p294 = pneg %p190
        %s295 = smul.u32 2, %s20
        %p296 = scmp.lt.s32.totalorder %s295, 3
        %s297 = scalar_select %p296, %s295, 3
        %s298 = smul.addr %s297, 8
        %s299 = scalar_lea.vmem %s7, %s298
        %s300 = smul.u32 2, %s20
        %p301 = scmp.lt.s32.totalorder %s300, 3
        %s302 = scalar_select %p301, %s300, 3
        %s303 = smul.addr %s302, 4
        %s304 = scalar_lea.vmem %s0, %s303
        %s305 = smul.u32 2, %s20
        %s306 = smul.u32 2, %s20
        %p307 = scmp.lt.s32.totalorder %s306, 3
        %s308 = scalar_select %p307, %s306, 3
        %s309 = smul.addr %s308, 8
        %s310 = scalar_lea.vmem %s7, %s309
        %s311 = smul.u32 2, %s20
        %v313 = vld [vmem:[%s304] sm:$0xf]
        %v314 = vld [vmem:[%s304 + $0x4] sm:$0xf]
        %v315 = vld [vmem:[%s1] sm:$0xf]
        %v316 = vld [vmem:[%s1 + $0x4] sm:$0xf]
        %v317 = vld [vmem:[%s1 + $0x8] sm:$0xf]
        %v318 = vld [vmem:[%s1 + $0xc] sm:$0xf]
        %v319 = vld [vmem:[%s1 + $0x10] sm:$0xf]
        %v320 = vld [vmem:[%s1 + $0x14] sm:$0xf]
        %v321 = vld [vmem:[%s1 + $0x18] sm:$0xf]
        %v322 = vld [vmem:[%s1 + $0x1c] sm:$0xf]
        %v323 = vld [vmem:[%s1 + $0x20] sm:$0xf]
        %v324 = vld [vmem:[%s1 + $0x24] sm:$0xf]
        %v325 = vld [vmem:[%s1 + $0x28] sm:$0xf]
        %v326 = vld [vmem:[%s1 + $0x2c] sm:$0xf]
        %v327 = vld [vmem:[%s1 + $0x30] sm:$0xf]
        %v328 = vld [vmem:[%s1 + $0x34] sm:$0xf]
        %v329 = vld [vmem:[%s1 + $0x38] sm:$0xf]
        %v330 = vld [vmem:[%s1 + $0x3c] sm:$0xf]
        %v331 = vld [vmem:[%s2] sm:$0x1]
        %v333 = vlaneseq
        %v334 = vshrl.u32 %v333, 7
        %v335 = vsub.s32 0, %v334
        %v336 = vrot.slane %v331, %v335
        %v340 = vunpack.c.l.b16 %v313
        %v341 = vunpack.c.l.b16 %v314
        %v342 = vpack.c.b16 %v341, %v340
        %v360 = vunpack.c.l.b16 %v315
        %v361 = vunpack.c.l.b16 %v316
        %v362 = vunpack.c.l.b16 %v317
        %v363 = vunpack.c.l.b16 %v318
        %v364 = vunpack.c.l.b16 %v319
        %v365 = vunpack.c.l.b16 %v320
        %v366 = vunpack.c.l.b16 %v321
        %v367 = vunpack.c.l.b16 %v322
        %v368 = vunpack.c.l.b16 %v323
        %v369 = vunpack.c.l.b16 %v324
        %v370 = vunpack.c.l.b16 %v325
        %v371 = vunpack.c.l.b16 %v326
        %v372 = vunpack.c.l.b16 %v327
        %v373 = vunpack.c.l.b16 %v328
        %v374 = vunpack.c.l.b16 %v329
        %v375 = vunpack.c.l.b16 %v330
        %v376 = vpack.c.b16 %v361, %v360
        %v377 = vpack.c.b16 %v363, %v362
        %v378 = vpack.c.b16 %v365, %v364
        %v379 = vpack.c.b16 %v367, %v366
        %v380 = vpack.c.b16 %v369, %v368
        %v381 = vpack.c.b16 %v371, %v370
        %v382 = vpack.c.b16 %v373, %v372
        %v383 = vpack.c.b16 %v375, %v374
        %392 = vmatprep.subr.bf16.mxu0 0
        %393 = vmatpush1.bf16.msra.mxu0 %v383
        %394 = vmatprep.subr.bf16.mxu0 0
        %395 = vmatpush1.bf16.msra.mxu0 %v382
        %396 = vmatprep.subr.bf16.mxu0 0
        %397 = vmatpush1.bf16.msra.mxu0 %v381
        %398 = vmatprep.subr.bf16.mxu0 0
        %399 = vmatpush1.bf16.msra.mxu0 %v380
        %400 = vmatprep.subr.bf16.mxu0 0
        %401 = vmatpush1.bf16.msra.mxu0 %v379
        %402 = vmatprep.subr.bf16.mxu0 0
        %403 = vmatpush1.bf16.msra.mxu0 %v378
        %404 = vmatprep.subr.bf16.mxu0 0
        %405 = vmatpush1.bf16.msra.mxu0 %v377
        %406 = vmatprep.subr.bf16.mxu0 0
        %407 = vmatpush1.bf16.msra.mxu0 %v376
        %408 = vmatprep.subr.bf16.mxu0 0
        %409 = vmatpush2.bf16.msra.mxu0 0
        %410 = vmatprep.subr.bf16.mxu0 0
        %411 = vmatpush2.bf16.msra.mxu0 0
        %412 = vmatprep.subr.bf16.mxu0 0
        %413 = vmatpush2.bf16.msra.mxu0 0
        %414 = vmatprep.subr.bf16.mxu0 0
        %415 = vmatpush2.bf16.msra.mxu0 0
        %416 = vmatprep.subr.bf16.mxu0 0
        %417 = vmatpush2.bf16.msra.mxu0 0
        %418 = vmatprep.subr.bf16.mxu0 0
        %419 = vmatpush2.bf16.msra.mxu0 0
        %420 = vmatprep.subr.bf16.mxu0 0
        %421 = vmatpush2.bf16.msra.mxu0 0
        %422 = vmatprep.subr.bf16.mxu0 0
        %423 = vmatpush2.bf16.msra.mxu0 0
        %424 = vmatprep.mubr.bf16.mxu0 0
        %425 = vmatmul.mubr.bf16.gmra.mxu0 %v342
        %v426 = vpop.f32.mrf.mxu0
        %v427 = vadd.f32 %v336, %v426
        %v428 = vpop.f32.mrf.mxu0
        %v429 = vpop.f32.mrf.mxu0
        %v430 = vadd.f32 %v336, %v429
        %v431 = vpop.f32.mrf.mxu0
        %432 = vdwg.mxu0
        %v433 = vmax.f32 %v427, 0.0
        %v434 = vmax.f32 %v430, 0.0
        %v435 = vpack.c.bf16 %v434, %v433
        %v436 = vld [vmem:[#allocation2] sm:$0xf]
        %v437 = vld [vmem:[#allocation2 + $0x4] sm:$0xf]
        %v438 = vld [vmem:[#allocation2 + $0x8] sm:$0xf]
        %v439 = vld [vmem:[#allocation2 + $0xc] sm:$0xf]
        %v440 = vld [vmem:[#allocation2 + $0x10] sm:$0xf]
        %v441 = vld [vmem:[#allocation2 + $0x14] sm:$0xf]
        %v442 = vld [vmem:[#allocation2 + $0x18] sm:$0xf]
        %v443 = vld [vmem:[#allocation2 + $0x1c] sm:$0xf]
        %v444 = vld [vmem:[#allocation2 + $0x20] sm:$0xf]
        %v445 = vld [vmem:[#allocation2 + $0x24] sm:$0xf]
        %v446 = vld [vmem:[#allocation2 + $0x28] sm:$0xf]
        %v447 = vld [vmem:[#allocation2 + $0x2c] sm:$0xf]
        %v448 = vld [vmem:[#allocation2 + $0x30] sm:$0xf]
        %v449 = vld [vmem:[#allocation2 + $0x34] sm:$0xf]
        %v450 = vld [vmem:[#allocation2 + $0x38] sm:$0xf]
        %v451 = vld [vmem:[#allocation2 + $0x3c] sm:$0xf]
        %v452 = vld [vmem:[%s4] sm:$0x1]
        %v454 = vlaneseq
        %v455 = vshrl.u32 %v454, 7
        %v456 = vsub.s32 0, %v455
        %v457 = vrot.slane %v452, %v456
        %v475 = vunpack.c.l.b16 %v436
        %v476 = vunpack.c.l.b16 %v437
        %v477 = vunpack.c.l.b16 %v438
        %v478 = vunpack.c.l.b16 %v439
        %v479 = vunpack.c.l.b16 %v440
        %v480 = vunpack.c.l.b16 %v441
        %v481 = vunpack.c.l.b16 %v442
        %v482 = vunpack.c.l.b16 %v443
        %v483 = vunpack.c.l.b16 %v444
        %v484 = vunpack.c.l.b16 %v445
        %v485 = vunpack.c.l.b16 %v446
        %v486 = vunpack.c.l.b16 %v447
        %v487 = vunpack.c.l.b16 %v448
        %v488 = vunpack.c.l.b16 %v449
        %v489 = vunpack.c.l.b16 %v450
        %v490 = vunpack.c.l.b16 %v451
        %v491 = vpack.c.b16 %v476, %v475
        %v492 = vpack.c.b16 %v478, %v477
        %v493 = vpack.c.b16 %v480, %v479
        %v494 = vpack.c.b16 %v482, %v481
        %v495 = vpack.c.b16 %v484, %v483
        %v496 = vpack.c.b16 %v486, %v485
        %v497 = vpack.c.b16 %v488, %v487
        %v498 = vpack.c.b16 %v490, %v489
        %507 = vmatprep.subr.bf16.mxu0 0
        %508 = vmatpush1.bf16.msra.mxu0 %v498
        %509 = vmatprep.subr.bf16.mxu0 0
        %510 = vmatpush1.bf16.msra.mxu0 %v497
        %511 = vmatprep.subr.bf16.mxu0 0
        %512 = vmatpush1.bf16.msra.mxu0 %v496
        %513 = vmatprep.subr.bf16.mxu0 0
        %514 = vmatpush1.bf16.msra.mxu0 %v495
        %515 = vmatprep.subr.bf16.mxu0 0
        %516 = vmatpush1.bf16.msra.mxu0 %v494
        %517 = vmatprep.subr.bf16.mxu0 0
        %518 = vmatpush1.bf16.msra.mxu0 %v493
        %519 = vmatprep.subr.bf16.mxu0 0
        %520 = vmatpush1.bf16.msra.mxu0 %v492
        %521 = vmatprep.subr.bf16.mxu0 0
        %522 = vmatpush1.bf16.msra.mxu0 %v491
        %523 = vmatprep.subr.bf16.mxu0 0
        %524 = vmatpush2.bf16.msra.mxu0 0
        %525 = vmatprep.subr.bf16.mxu0 0
        %526 = vmatpush2.bf16.msra.mxu0 0
        %527 = vmatprep.subr.bf16.mxu0 0
        %528 = vmatpush2.bf16.msra.mxu0 0
        %529 = vmatprep.subr.bf16.mxu0 0
        %530 = vmatpush2.bf16.msra.mxu0 0
        %531 = vmatprep.subr.bf16.mxu0 0
        %532 = vmatpush2.bf16.msra.mxu0 0
        %533 = vmatprep.subr.bf16.mxu0 0
        %534 = vmatpush2.bf16.msra.mxu0 0
        %535 = vmatprep.subr.bf16.mxu0 0
        %536 = vmatpush2.bf16.msra.mxu0 0
        %537 = vmatprep.subr.bf16.mxu0 0
        %538 = vmatpush2.bf16.msra.mxu0 0
        %539 = vmatprep.mubr.bf16.mxu0 0
        %540 = vmatmul.mubr.bf16.gmra.mxu0 %v435
        %v541 = vpop.f32.mrf.mxu0
        %v542 = vadd.f32 %v457, %v541
        %v543 = vpop.f32.mrf.mxu0
        %v544 = vpop.f32.mrf.mxu0
        %v545 = vadd.f32 %v457, %v544
        %v546 = vpop.f32.mrf.mxu0
        %547 = vdwg.mxu0
        %v548 = vmax.f32 %v542, 0.0
        %v549 = vmax.f32 %v545, 0.0
        %v550 = vpack.c.bf16 %v549, %v548
        %v551 = vld [vmem:[#allocation4] sm:$0xf]
        %v552 = vld [vmem:[#allocation4 + $0x4] sm:$0xf]
        %v553 = vld [vmem:[#allocation4 + $0x8] sm:$0xf]
        %v554 = vld [vmem:[#allocation4 + $0xc] sm:$0xf]
        %v555 = vld [vmem:[#allocation4 + $0x10] sm:$0xf]
        %v556 = vld [vmem:[#allocation4 + $0x14] sm:$0xf]
        %v557 = vld [vmem:[#allocation4 + $0x18] sm:$0xf]
        %v558 = vld [vmem:[#allocation4 + $0x1c] sm:$0xf]
        %v559 = vld [vmem:[#allocation4 + $0x20] sm:$0xf]
        %v560 = vld [vmem:[#allocation4 + $0x24] sm:$0xf]
        %v561 = vld [vmem:[#allocation4 + $0x28] sm:$0xf]
        %v562 = vld [vmem:[#allocation4 + $0x2c] sm:$0xf]
        %v563 = vld [vmem:[#allocation4 + $0x30] sm:$0xf]
        %v564 = vld [vmem:[#allocation4 + $0x34] sm:$0xf]
        %v565 = vld [vmem:[#allocation4 + $0x38] sm:$0xf]
        %v566 = vld [vmem:[#allocation4 + $0x3c] sm:$0xf]
        %v567 = vld [vmem:[%s6] sm:$0x1]
        %v569 = vlaneseq
        %v570 = vshrl.u32 %v569, 7
        %v571 = vsub.s32 0, %v570
        %v572 = vrot.slane %v567, %v571
        %v590 = vunpack.c.l.b16 %v551
        %v591 = vunpack.c.l.b16 %v552
        %v592 = vunpack.c.l.b16 %v553
        %v593 = vunpack.c.l.b16 %v554
        %v594 = vunpack.c.l.b16 %v555
        %v595 = vunpack.c.l.b16 %v556
        %v596 = vunpack.c.l.b16 %v557
        %v597 = vunpack.c.l.b16 %v558
        %v598 = vunpack.c.l.b16 %v559
        %v599 = vunpack.c.l.b16 %v560
        %v600 = vunpack.c.l.b16 %v561
        %v601 = vunpack.c.l.b16 %v562
        %v602 = vunpack.c.l.b16 %v563
        %v603 = vunpack.c.l.b16 %v564
        %v604 = vunpack.c.l.b16 %v565
        %v605 = vunpack.c.l.b16 %v566
        %v606 = vpack.c.b16 %v591, %v590
        %v607 = vpack.c.b16 %v593, %v592
        %v608 = vpack.c.b16 %v595, %v594
        %v609 = vpack.c.b16 %v597, %v596
        %v610 = vpack.c.b16 %v599, %v598
        %v611 = vpack.c.b16 %v601, %v600
        %v612 = vpack.c.b16 %v603, %v602
        %v613 = vpack.c.b16 %v605, %v604
        %622 = vmatprep.subr.bf16.mxu0 0
        %623 = vmatpush1.bf16.msra.mxu0 %v613
        %624 = vmatprep.subr.bf16.mxu0 0
        %625 = vmatpush1.bf16.msra.mxu0 %v612
        %626 = vmatprep.subr.bf16.mxu0 0
        %627 = vmatpush1.bf16.msra.mxu0 %v611
        %628 = vmatprep.subr.bf16.mxu0 0
        %629 = vmatpush1.bf16.msra.mxu0 %v610
        %630 = vmatprep.subr.bf16.mxu0 0
        %631 = vmatpush1.bf16.msra.mxu0 %v609
        %632 = vmatprep.subr.bf16.mxu0 0
        %633 = vmatpush1.bf16.msra.mxu0 %v608
        %634 = vmatprep.subr.bf16.mxu0 0
        %635 = vmatpush1.bf16.msra.mxu0 %v607
        %636 = vmatprep.subr.bf16.mxu0 0
        %637 = vmatpush1.bf16.msra.mxu0 %v606
        %638 = vmatprep.subr.bf16.mxu0 0
        %639 = vmatpush2.bf16.msra.mxu0 0
        %640 = vmatprep.subr.bf16.mxu0 0
        %641 = vmatpush2.bf16.msra.mxu0 0
        %642 = vmatprep.subr.bf16.mxu0 0
        %643 = vmatpush2.bf16.msra.mxu0 0
        %644 = vmatprep.subr.bf16.mxu0 0
        %645 = vmatpush2.bf16.msra.mxu0 0
        %646 = vmatprep.subr.bf16.mxu0 0
        %647 = vmatpush2.bf16.msra.mxu0 0
        %648 = vmatprep.subr.bf16.mxu0 0
        %649 = vmatpush2.bf16.msra.mxu0 0
        %650 = vmatprep.subr.bf16.mxu0 0
        %651 = vmatpush2.bf16.msra.mxu0 0
        %652 = vmatprep.subr.bf16.mxu0 0
        %653 = vmatpush2.bf16.msra.mxu0 0
        %654 = vmatprep.mubr.bf16.mxu0 0
        %655 = vmatmul.mubr.bf16.gmra.mxu0 %v550
        %v656 = vpop.f32.mrf.mxu0
        %v657 = vadd.f32 %v572, %v656
        %v658 = vpop.f32.mrf.mxu0
        %v659 = vpop.f32.mrf.mxu0
        %v660 = vadd.f32 %v572, %v659
        %v661 = vpop.f32.mrf.mxu0
        %662 = vdwg.mxu0
        %663 = vst [vmem:[%s310] sm:$0xff] %v657
        %664 = vst [vmem:[%s310 + $0x8] sm:$0xff] %v660
        %s665 = smul.u32 2, %s20
        %p666 = scmp.lt.s32.totalorder %s665, 3
        %s667 = scalar_select %p666, %s665, 3
        %s668 = smul.addr %s667, 8
        %s669 = scalar_lea.vmem %s7, %s668
        // Predicated region
        $region57: #{mlp_classifier_forward.1} parent=47 // pred_check
          %p670 = pneg %p190
        $region58: #{mlp_classifier_forward.1} parent=47 // pred_check_branch
          %672 = sbr.rel (%p670) target = $region60
        $region59: #{mlp_classifier_forward.1} parent=47 // pred_region
          %s673 = smul.u32 2, %s20
        $region60: #{mlp_classifier_forward.1} parent=47 // pred_fallthru
          _
      $region48: #{mlp_classifier_forward.1} parent=5 // pred_fallthru
        _
      %p674 = scmp.le.s32.totalorder 2, %s15
      // Predicated region
      $region61: #{mlp_classifier_forward.1} parent=5 // pred_check
        %p675 = pneg %p674
      $region62: #{mlp_classifier_forward.1} parent=5 // pred_check_branch
        %677 = sbr.rel (%p675) target = $region64
      $region63: #{mlp_classifier_forward.1} parent=5 // pred_region
        %s678 = ssub.s32 %s15, 2
        // Predicated region
        $region65: #{mlp_classifier_forward.1} parent=63 // pred_check
          %p679 = pneg %p196
        $region66: #{mlp_classifier_forward.1} parent=63 // pred_check_branch
          %681 = sbr.rel (%p679) target = $region68
        $region67: #{mlp_classifier_forward.1} parent=63 // pred_region
          %s682 = smul.u32 2, %s21
          %p683 = scmp.lt.s32.totalorder %s682, 3
          %s684 = scalar_select %p683, %s682, 3
          %s685 = smul.addr %s684, 8
          %s686 = scalar_lea.vmem %s7, %s685
        $region68: #{mlp_classifier_forward.1} parent=63 // pred_fallthru
          _
      $region64: #{mlp_classifier_forward.1} parent=5 // pred_fallthru
        _
    $region6: #{mlp_classifier_forward.1} parent=1 // loop_footer
      %s19 = sadd.s32 1, %s15
    $region7: #{mlp_classifier_forward.1} parent=1 // loop_footer_branch
      %14 = sbr.rel target = $region3
    $region8: #{mlp_classifier_forward.1} parent=1 // loop_exit
      _
    %687 = vsyncpa [#allocation3], 1
    %s688 = scalar_lea.sflag [#allocation3], 1
    %689 = vsyncpa %s688, 1
    %690 = vsyncpa [#allocation5], 1

</llo_original>
